<compile_context>
chip_gen: v7x
topology: tpu7x:2x2x1
jax: 0.10.0
libtpu: 0.0.40
codegen_flags: <defaults>
</compile_context>

<pallas_src>
import math
import jax
import jax.numpy as jnp
import numpy as np
from jax.experimental import pallas as pl
from jax.experimental.pallas import tpu as pltpu


LANE = 128                     # pad FC output dim to a multiple of the lane width
_X_TILE_BYTES = 8 << 20        # per-buffer budget for the x batch tile (double-buffered)


# ----------------------------------------------------------------------------
# Fused kernel: per-clip base network + LSTM recurrence + final FC.
# ----------------------------------------------------------------------------
def vcopn_fused_kernel(x_ref, wb_ref, wih_ref, whh_ref, bg_ref, wfc_ref,
                       bfc_ref, out_ref):
    # x_ref:   (TB, L*C, S)  f32  clips for TB batch rows; row t*C + c is channel c
    #                             of clip t, S = T*H*W spatial/temporal elements.
    # wb_ref:  (C, F)   f32  base Linear(C, F) weight (applied after in-kernel pool)
    # wih_ref: (F, 4H)  bf16 LSTM W_ih^T, gate order [i, f, g, o]
    # whh_ref: (H, 4H)  bf16 LSTM W_hh^T
    # bg_ref:  (1, 4H)  f32  b_ih + b_hh + b_base @ W_ih^T  (base bias folded in)
    # wfc_ref: (H, CP)  bf16 final FC weight, lane-padded to CP (multiple of 128)
    # bfc_ref: (1, CP)  f32  lane-padded FC bias
    # out_ref: (TB, CP) f32
    TB = x_ref.shape[0]
    S = x_ref.shape[2]
    C, F = wb_ref.shape
    H = whh_ref.shape[0]
    L = x_ref.shape[1] // C

    wb = wb_ref[...]          # f32, tiny (C, F)
    wih = wih_ref[...]        # bf16 (F, 4H)
    whh = whh_ref[...]        # bf16 (H, 4H)
    bg = bg_ref[...]          # f32  (1, 4H)
    inv_s = 1.0 / S           # static

    # ---- hoisted work (off the serial recurrence) ---------------------------
    # Base network: global average pool over S (lane reduce, XLU) + Linear(C, F).
    # K = C is tiny, so the projection is C VPU broadcast-MACs rather than an MXU
    # call.  The LSTM input projection feat @ W_ih (+ folded biases) for every
    # timestep is also computed here, so nothing with a long contraction remains
    # on the h-dependency chain.
    gx = []
    for t in range(L):
        feat_t = jnp.zeros((TB, F), jnp.float32)
        for c in range(C):
            m_tc = jnp.sum(x_ref[:, t * C + c, :], axis=-1, keepdims=True) * inv_s
            feat_t = feat_t + m_tc * wb[c:c + 1, :]                  # (TB, F) f32
        gx_t = jnp.dot(feat_t.astype(jnp.bfloat16), wih,
                       preferred_element_type=jnp.float32) + bg      # (TB, 4H) f32
        gx.append(gx_t)

    # ---- serial LSTM recurrence: per step only (TB,H)@(H,4H) + VPU/EUP -------
    h = jnp.zeros((TB, H), jnp.float32)
    c_state = jnp.zeros((TB, H), jnp.float32)
    for t in range(L):
        gates = gx[t] + jnp.dot(h.astype(jnp.bfloat16), whh,
                                preferred_element_type=jnp.float32)   # (TB, 4H)
        # Sub-128-lane gate slices are negligible at H=32; for large H split the
        # gate weights column-wise at parameter-build time instead.
        i_g = jax.nn.sigmoid(gates[:, 0 * H:1 * H])
        f_g = jax.nn.sigmoid(gates[:, 1 * H:2 * H])
        g_g = jnp.tanh(gates[:, 2 * H:3 * H])
        o_g = jax.nn.sigmoid(gates[:, 3 * H:4 * H])
        c_state = f_g * c_state + i_g * g_g
        h = o_g * jnp.tanh(c_state)

    # Final FC on h_n; output is lane-dense (CP multiple of 128), sliced outside.
    out_ref[...] = (
        jnp.dot(h.astype(jnp.bfloat16), wfc_ref[...],
                preferred_element_type=jnp.float32)
        + bfc_ref[...]
    )


# ----------------------------------------------------------------------------
# One-time parameter preparation (NOT in the per-call forward path).
# ----------------------------------------------------------------------------
def prepare_params(params):
    H = params["w_hh_t"].shape[0]
    class_num = params["w_fc_t"].shape[1]
    CP = ((class_num + LANE - 1) // LANE) * LANE
    wfc_pad = jnp.zeros((H, CP), jnp.float32).at[:, :class_num].set(params["w_fc_t"])
    bfc_pad = jnp.zeros((1, CP), jnp.float32).at[:, :class_num].set(params["b_fc"])
    # Fold the base-network bias through the input projection: (bb @ W_ih^T) + b_ih + b_hh.
    bg = params["b_gates"] + params["b_base"] @ params["w_ih_t"]
    return {
        "wb": params["w_base"].astype(jnp.float32),     # (C, F)  f32 (VPU MAC path)
        "wih": params["w_ih_t"].astype(jnp.bfloat16),   # (F, 4H) bf16 MXU operand
        "whh": params["w_hh_t"].astype(jnp.bfloat16),   # (H, 4H) bf16 MXU operand
        "bg": bg.astype(jnp.float32),                   # (1, 4H) f32
        "wfc": wfc_pad.astype(jnp.bfloat16),            # (H, CP) bf16 MXU operand
        "bfc": bfc_pad,                                 # (1, CP) f32
        "class_num": class_num,
    }


def _pick_batch_tile(B, x_bytes_per_row):
    # Largest batch tile whose double-buffered x DMA stays inside a conservative
    # VMEM budget (sized for v7x's 64 MiB physical / 32 MiB default scoped VMEM;
    # also fine on v5e/v6e).  The output block's second-minor dim is TB, so keep
    # TB a multiple of 8 (or equal to B) for aligned sublane-dense stores.
    tb = max(1, _X_TILE_BYTES // (2 * x_bytes_per_row))
    if tb >= B:
        return B
    return max(8, (tb // 8) * 8)


# ----------------------------------------------------------------------------
# Full VCOPN_RNN forward (layout plumbing only in JAX, all compute in Pallas)
# ----------------------------------------------------------------------------
def vcopn_rnn_forward(x, kparams, batch_tile=None):
    # x: (B, L, C, T, H, W) f32
    B, L, C, T, Hs, Ws = x.shape
    S = T * Hs * Ws
    # Contiguous reshape only -- no transpose, no HBM copy of the clip tensor.
    x_blk = x.reshape(B, L * C, S)

    F = kparams["wb"].shape[1]
    H = kparams["whh"].shape[0]
    CP = kparams["wfc"].shape[1]
    TB = batch_tile if batch_tile is not None else _pick_batch_tile(B, L * C * S * 4)
    grid = (pl.cdiv(B, TB),)

    logits_pad = pl.pallas_call(
        vcopn_fused_kernel,
        out_shape=jax.ShapeDtypeStruct((B, CP), jnp.float32),
        grid=grid,
        in_specs=[
            pl.BlockSpec((TB, L * C, S), lambda b: (b, 0, 0)),   # x: tiled over batch
            pl.BlockSpec((C, F), lambda b: (0, 0)),              # weights: constant
            pl.BlockSpec((F, 4 * H), lambda b: (0, 0)),          #  index_map -> stay
            pl.BlockSpec((H, 4 * H), lambda b: (0, 0)),          #  VMEM-resident
            pl.BlockSpec((1, 4 * H), lambda b: (0, 0)),
            pl.BlockSpec((H, CP), lambda b: (0, 0)),
            pl.BlockSpec((1, CP), lambda b: (0, 0)),
        ],
        out_specs=pl.BlockSpec((TB, CP), lambda b: (b, 0)),
        compiler_params=pltpu.CompilerParams(
            # Batch blocks are independent -> "parallel": the auto-pipeline
            # overlaps x-tile DMA with compute and v7x shards blocks across its
            # two TensorCores (no effect on single-TC v5e/v6e).
            dimension_semantics=("parallel",)),
    )(x_blk, kparams["wb"], kparams["wih"], kparams["whh"], kparams["bg"],
      kparams["wfc"], kparams["bfc"])
    return logits_pad[:, :kparams["class_num"]]


# ----------------------------------------------------------------------------
# Pure-JAX f32 reference matching the PyTorch module semantics.
# ----------------------------------------------------------------------------
def reference_forward(x, params):
    B, L, C, T, Hsp, Wsp = x.shape
    x_seq = jnp.transpose(x, (1, 0, 2, 3, 4, 5)).reshape(L * B, C, T * Hsp * Wsp)
    feats = jnp.mean(x_seq, axis=-1) @ params["w_base"] + params["b_base"]
    F = feats.shape[-1]
    feats_seq = feats.reshape(L, B, F)
    H = params["w_hh_t"].shape[0]

    def step(carry, x_t):
        h, c = carry
        gates = x_t @ params["w_ih_t"] + h @ params["w_hh_t"] + params["b_gates"]
        i = jax.nn.sigmoid(gates[:, 0 * H:1 * H])
        f = jax.nn.sigmoid(gates[:, 1 * H:2 * H])
        g = jnp.tanh(gates[:, 2 * H:3 * H])
        o = jax.nn.sigmoid(gates[:, 3 * H:4 * H])
        c = f * c + i * g
        h = o * jnp.tanh(c)
        return (h, c), None

    h0 = jnp.zeros((B, H), jnp.float32)
    (hn, _), _ = jax.lax.scan(step, (h0, h0), feats_seq)
    return hn @ params["w_fc_t"] + params["b_fc"]


if __name__ == "__main__":
    # Small, module-consistent shapes.  B=16 with batch_tile=8 exercises a
    # multi-block "parallel" grid (weights resident, x tiles pipelined).
    B, L = 16, 3                   # batch, tuple_len
    C, T, Hsp, Wsp = 4, 4, 8, 8    # clip channels / frames / spatial
    F = 64                         # feature_size
    H = 32                         # hidden_size
    class_num = math.factorial(L)  # 6

    key = jax.random.PRNGKey(0)
    keys = jax.random.split(key, 8)

    x = jax.random.normal(keys[0], (B, L, C, T, Hsp, Wsp), jnp.float32)

    params = {
        # synthetic base network: pool + Linear(C, F)
        "w_base": 0.1 * jax.random.normal(keys[1], (C, F), jnp.float32),
        "b_base": 0.1 * jax.random.normal(keys[2], (1, F), jnp.float32),
        # LSTM weights (stored transposed for x @ W^T), gate order [i, f, g, o]
        "w_ih_t": 0.1 * jax.random.normal(keys[3], (F, 4 * H), jnp.float32),
        "w_hh_t": 0.1 * jax.random.normal(keys[4], (H, 4 * H), jnp.float32),
        "b_gates": 0.1 * jax.random.normal(keys[5], (1, 4 * H), jnp.float32),  # b_ih + b_hh
        # final FC
        "w_fc_t": 0.1 * jax.random.normal(keys[6], (H, class_num), jnp.float32),
        "b_fc": 0.1 * jax.random.normal(keys[7], (1, class_num), jnp.float32),
    }

    kparams = prepare_params(params)   # one-time folds / pads / bf16 casts

    out = jax.block_until_ready(vcopn_rnn_forward(x, kparams, batch_tile=8))
    ref = jax.block_until_ready(reference_forward(x, params))

    assert out.shape == (B, class_num), out.shape
    # bf16 MXU operands (f32 accumulate) -> looser tolerance than the f32 reference.
    np.testing.assert_allclose(np.asarray(out), np.asarray(ref), atol=1e-2, rtol=1e-2)
    print("KERNEL_OK")
</pallas_src>

<mosaic_0001>
module attributes {stable_mosaic.version = 11 : i64} {
  func.func @vcopn_fused_kernel(%arg0: i32, %arg1: memref<8x12x256xf32, #tpu.memory_space<vmem>>, %arg2: memref<4x64xf32, #tpu.memory_space<vmem>>, %arg3: memref<64x128xbf16, #tpu.memory_space<vmem>>, %arg4: memref<32x128xbf16, #tpu.memory_space<vmem>>, %arg5: memref<1x128xf32, #tpu.memory_space<vmem>>, %arg6: memref<32x128xbf16, #tpu.memory_space<vmem>>, %arg7: memref<1x128xf32, #tpu.memory_space<vmem>>, %arg8: memref<8x128xf32, #tpu.memory_space<vmem>>) attributes {dimension_semantics = [#tpu.dimension_semantics<parallel>], iteration_bounds = array<i64: 2>, scalar_prefetch = 0 : i64, scratch_operands = 0 : i64, tpu.core_type = #tpu.core_type<tc>, window_params = [{transform_indices = @transform_0, window_bounds = array<i64: 8, 12, 256>}, {pipeline_mode = #tpu.pipeline_mode<synchronous>, transform_indices = @transform_1, window_bounds = array<i64: 4, 64>}, {pipeline_mode = #tpu.pipeline_mode<synchronous>, transform_indices = @transform_2, window_bounds = array<i64: 64, 128>}, {pipeline_mode = #tpu.pipeline_mode<synchronous>, transform_indices = @transform_3, window_bounds = array<i64: 32, 128>}, {pipeline_mode = #tpu.pipeline_mode<synchronous>, transform_indices = @transform_4, window_bounds = array<i64: 1, 128>}, {pipeline_mode = #tpu.pipeline_mode<synchronous>, transform_indices = @transform_5, window_bounds = array<i64: 32, 128>}, {pipeline_mode = #tpu.pipeline_mode<synchronous>, transform_indices = @transform_6, window_bounds = array<i64: 1, 128>}, {transform_indices = @transform_7, window_bounds = array<i64: 8, 128>}]} {
    %c0 = arith.constant 0 : index
    %c0_0 = arith.constant 0 : index
    %0 = vector.load %arg2[%c0, %c0_0] : memref<4x64xf32, #tpu.memory_space<vmem>>, vector<4x64xf32>
    %c0_1 = arith.constant 0 : index
    %c0_2 = arith.constant 0 : index
    %1 = vector.load %arg3[%c0_1, %c0_2] : memref<64x128xbf16, #tpu.memory_space<vmem>>, vector<64x128xbf16>
    %c0_3 = arith.constant 0 : index
    %c0_4 = arith.constant 0 : index
    %2 = vector.load %arg4[%c0_3, %c0_4] : memref<32x128xbf16, #tpu.memory_space<vmem>>, vector<32x128xbf16>
    %c0_5 = arith.constant 0 : index
    %c0_6 = arith.constant 0 : index
    %3 = vector.load %arg5[%c0_5, %c0_6] : memref<1x128xf32, #tpu.memory_space<vmem>>, vector<1x128xf32>
    %cst = arith.constant 0.000000e+00 : f32
    %4 = vector.broadcast %cst : f32 to vector<8x64xf32>
    %c0_7 = arith.constant 0 : index
    %c0_8 = arith.constant 0 : index
    %c0_9 = arith.constant 0 : index
    %5 = vector.load %arg1[%c0_7, %c0_8, %c0_9] : memref<8x12x256xf32, #tpu.memory_space<vmem>>, vector<8x1x256xf32>
    %6 = vector.shape_cast %5 : vector<8x1x256xf32> to vector<8x256xf32>
    %cst_10 = arith.constant dense<0.000000e+00> : vector<8xf32>
    %7 = vector.multi_reduction <add>, %6, %cst_10 [1] : vector<8x256xf32> to vector<8xf32>
    %8 = vector.shape_cast %7 : vector<8xf32> to vector<8x1xf32>
    %cst_11 = arith.constant 3.906250e-03 : f32
    %9 = vector.broadcast %cst_11 : f32 to vector<8x1xf32>
    %10 = arith.mulf %8, %9 : vector<8x1xf32>
    %11 = vector.extract_strided_slice %0 {offsets = [0, 0], sizes = [1, 64], strides = [1, 1]} : vector<4x64xf32> to vector<1x64xf32>
    %12 = vector.broadcast %10 : vector<8x1xf32> to vector<8x64xf32>
    %13 = vector.broadcast %11 : vector<1x64xf32> to vector<8x64xf32>
    %14 = arith.mulf %12, %13 : vector<8x64xf32>
    %15 = arith.addf %4, %14 : vector<8x64xf32>
    %c0_12 = arith.constant 0 : index
    %c1 = arith.constant 1 : index
    %c0_13 = arith.constant 0 : index
    %16 = vector.load %arg1[%c0_12, %c1, %c0_13] : memref<8x12x256xf32, #tpu.memory_space<vmem>>, vector<8x1x256xf32>
    %17 = vector.shape_cast %16 : vector<8x1x256xf32> to vector<8x256xf32>
    %cst_14 = arith.constant dense<0.000000e+00> : vector<8xf32>
    %18 = vector.multi_reduction <add>, %17, %cst_14 [1] : vector<8x256xf32> to vector<8xf32>
    %19 = vector.shape_cast %18 : vector<8xf32> to vector<8x1xf32>
    %cst_15 = arith.constant 3.906250e-03 : f32
    %20 = vector.broadcast %cst_15 : f32 to vector<8x1xf32>
    %21 = arith.mulf %19, %20 : vector<8x1xf32>
    %22 = vector.extract_strided_slice %0 {offsets = [1, 0], sizes = [1, 64], strides = [1, 1]} : vector<4x64xf32> to vector<1x64xf32>
    %23 = vector.broadcast %21 : vector<8x1xf32> to vector<8x64xf32>
    %24 = vector.broadcast %22 : vector<1x64xf32> to vector<8x64xf32>
    %25 = arith.mulf %23, %24 : vector<8x64xf32>
    %26 = arith.addf %15, %25 : vector<8x64xf32>
    %c0_16 = arith.constant 0 : index
    %c2 = arith.constant 2 : index
    %c0_17 = arith.constant 0 : index
    %27 = vector.load %arg1[%c0_16, %c2, %c0_17] : memref<8x12x256xf32, #tpu.memory_space<vmem>>, vector<8x1x256xf32>
    %28 = vector.shape_cast %27 : vector<8x1x256xf32> to vector<8x256xf32>
    %cst_18 = arith.constant dense<0.000000e+00> : vector<8xf32>
    %29 = vector.multi_reduction <add>, %28, %cst_18 [1] : vector<8x256xf32> to vector<8xf32>
    %30 = vector.shape_cast %29 : vector<8xf32> to vector<8x1xf32>
    %cst_19 = arith.constant 3.906250e-03 : f32
    %31 = vector.broadcast %cst_19 : f32 to vector<8x1xf32>
    %32 = arith.mulf %30, %31 : vector<8x1xf32>
    %33 = vector.extract_strided_slice %0 {offsets = [2, 0], sizes = [1, 64], strides = [1, 1]} : vector<4x64xf32> to vector<1x64xf32>
    %34 = vector.broadcast %32 : vector<8x1xf32> to vector<8x64xf32>
    %35 = vector.broadcast %33 : vector<1x64xf32> to vector<8x64xf32>
    %36 = arith.mulf %34, %35 : vector<8x64xf32>
    %37 = arith.addf %26, %36 : vector<8x64xf32>
    %c0_20 = arith.constant 0 : index
    %c3 = arith.constant 3 : index
    %c0_21 = arith.constant 0 : index
    %38 = vector.load %arg1[%c0_20, %c3, %c0_21] : memref<8x12x256xf32, #tpu.memory_space<vmem>>, vector<8x1x256xf32>
    %39 = vector.shape_cast %38 : vector<8x1x256xf32> to vector<8x256xf32>
    %cst_22 = arith.constant dense<0.000000e+00> : vector<8xf32>
    %40 = vector.multi_reduction <add>, %39, %cst_22 [1] : vector<8x256xf32> to vector<8xf32>
    %41 = vector.shape_cast %40 : vector<8xf32> to vector<8x1xf32>
    %cst_23 = arith.constant 3.906250e-03 : f32
    %42 = vector.broadcast %cst_23 : f32 to vector<8x1xf32>
    %43 = arith.mulf %41, %42 : vector<8x1xf32>
    %44 = vector.extract_strided_slice %0 {offsets = [3, 0], sizes = [1, 64], strides = [1, 1]} : vector<4x64xf32> to vector<1x64xf32>
    %45 = vector.broadcast %43 : vector<8x1xf32> to vector<8x64xf32>
    %46 = vector.broadcast %44 : vector<1x64xf32> to vector<8x64xf32>
    %47 = arith.mulf %45, %46 : vector<8x64xf32>
    %48 = arith.addf %37, %47 : vector<8x64xf32>
    %49 = arith.truncf %48 : vector<8x64xf32> to vector<8x64xbf16>
    %cst_24 = arith.constant dense<0.000000e+00> : vector<8x128xf32>
    %50 = tpu.matmul %49, %1, %cst_24 {dimension_numbers = #tpu.dot_dimension_numbers<[1], [0], [0], [1], [0, 0, 1, 1], [], []>} : vector<8x64xbf16>, vector<64x128xbf16>, vector<8x128xf32> -> vector<8x128xf32>
    %51 = vector.broadcast %3 : vector<1x128xf32> to vector<8x128xf32>
    %52 = arith.addf %50, %51 : vector<8x128xf32>
    %cst_25 = arith.constant 0.000000e+00 : f32
    %53 = vector.broadcast %cst_25 : f32 to vector<8x64xf32>
    %c0_26 = arith.constant 0 : index
    %c4 = arith.constant 4 : index
    %c0_27 = arith.constant 0 : index
    %54 = vector.load %arg1[%c0_26, %c4, %c0_27] : memref<8x12x256xf32, #tpu.memory_space<vmem>>, vector<8x1x256xf32>
    %55 = vector.shape_cast %54 : vector<8x1x256xf32> to vector<8x256xf32>
    %cst_28 = arith.constant dense<0.000000e+00> : vector<8xf32>
    %56 = vector.multi_reduction <add>, %55, %cst_28 [1] : vector<8x256xf32> to vector<8xf32>
    %57 = vector.shape_cast %56 : vector<8xf32> to vector<8x1xf32>
    %cst_29 = arith.constant 3.906250e-03 : f32
    %58 = vector.broadcast %cst_29 : f32 to vector<8x1xf32>
    %59 = arith.mulf %57, %58 : vector<8x1xf32>
    %60 = vector.extract_strided_slice %0 {offsets = [0, 0], sizes = [1, 64], strides = [1, 1]} : vector<4x64xf32> to vector<1x64xf32>
    %61 = vector.broadcast %59 : vector<8x1xf32> to vector<8x64xf32>
    %62 = vector.broadcast %60 : vector<1x64xf32> to vector<8x64xf32>
    %63 = arith.mulf %61, %62 : vector<8x64xf32>
    %64 = arith.addf %53, %63 : vector<8x64xf32>
    %c0_30 = arith.constant 0 : index
    %c5 = arith.constant 5 : index
    %c0_31 = arith.constant 0 : index
    %65 = vector.load %arg1[%c0_30, %c5, %c0_31] : memref<8x12x256xf32, #tpu.memory_space<vmem>>, vector<8x1x256xf32>
    %66 = vector.shape_cast %65 : vector<8x1x256xf32> to vector<8x256xf32>
    %cst_32 = arith.constant dense<0.000000e+00> : vector<8xf32>
    %67 = vector.multi_reduction <add>, %66, %cst_32 [1] : vector<8x256xf32> to vector<8xf32>
    %68 = vector.shape_cast %67 : vector<8xf32> to vector<8x1xf32>
    %cst_33 = arith.constant 3.906250e-03 : f32
    %69 = vector.broadcast %cst_33 : f32 to vector<8x1xf32>
    %70 = arith.mulf %68, %69 : vector<8x1xf32>
    %71 = vector.extract_strided_slice %0 {offsets = [1, 0], sizes = [1, 64], strides = [1, 1]} : vector<4x64xf32> to vector<1x64xf32>
    %72 = vector.broadcast %70 : vector<8x1xf32> to vector<8x64xf32>
    %73 = vector.broadcast %71 : vector<1x64xf32> to vector<8x64xf32>
    %74 = arith.mulf %72, %73 : vector<8x64xf32>
    %75 = arith.addf %64, %74 : vector<8x64xf32>
    %c0_34 = arith.constant 0 : index
    %c6 = arith.constant 6 : index
    %c0_35 = arith.constant 0 : index
    %76 = vector.load %arg1[%c0_34, %c6, %c0_35] : memref<8x12x256xf32, #tpu.memory_space<vmem>>, vector<8x1x256xf32>
    %77 = vector.shape_cast %76 : vector<8x1x256xf32> to vector<8x256xf32>
    %cst_36 = arith.constant dense<0.000000e+00> : vector<8xf32>
    %78 = vector.multi_reduction <add>, %77, %cst_36 [1] : vector<8x256xf32> to vector<8xf32>
    %79 = vector.shape_cast %78 : vector<8xf32> to vector<8x1xf32>
    %cst_37 = arith.constant 3.906250e-03 : f32
    %80 = vector.broadcast %cst_37 : f32 to vector<8x1xf32>
    %81 = arith.mulf %79, %80 : vector<8x1xf32>
    %82 = vector.extract_strided_slice %0 {offsets = [2, 0], sizes = [1, 64], strides = [1, 1]} : vector<4x64xf32> to vector<1x64xf32>
    %83 = vector.broadcast %81 : vector<8x1xf32> to vector<8x64xf32>
    %84 = vector.broadcast %82 : vector<1x64xf32> to vector<8x64xf32>
    %85 = arith.mulf %83, %84 : vector<8x64xf32>
    %86 = arith.addf %75, %85 : vector<8x64xf32>
    %c0_38 = arith.constant 0 : index
    %c7 = arith.constant 7 : index
    %c0_39 = arith.constant 0 : index
    %87 = vector.load %arg1[%c0_38, %c7, %c0_39] : memref<8x12x256xf32, #tpu.memory_space<vmem>>, vector<8x1x256xf32>
    %88 = vector.shape_cast %87 : vector<8x1x256xf32> to vector<8x256xf32>
    %cst_40 = arith.constant dense<0.000000e+00> : vector<8xf32>
    %89 = vector.multi_reduction <add>, %88, %cst_40 [1] : vector<8x256xf32> to vector<8xf32>
    %90 = vector.shape_cast %89 : vector<8xf32> to vector<8x1xf32>
    %cst_41 = arith.constant 3.906250e-03 : f32
    %91 = vector.broadcast %cst_41 : f32 to vector<8x1xf32>
    %92 = arith.mulf %90, %91 : vector<8x1xf32>
    %93 = vector.extract_strided_slice %0 {offsets = [3, 0], sizes = [1, 64], strides = [1, 1]} : vector<4x64xf32> to vector<1x64xf32>
    %94 = vector.broadcast %92 : vector<8x1xf32> to vector<8x64xf32>
    %95 = vector.broadcast %93 : vector<1x64xf32> to vector<8x64xf32>
    %96 = arith.mulf %94, %95 : vector<8x64xf32>
    %97 = arith.addf %86, %96 : vector<8x64xf32>
    %98 = arith.truncf %97 : vector<8x64xf32> to vector<8x64xbf16>
    %cst_42 = arith.constant dense<0.000000e+00> : vector<8x128xf32>
    %99 = tpu.matmul %98, %1, %cst_42 {dimension_numbers = #tpu.dot_dimension_numbers<[1], [0], [0], [1], [0, 0, 1, 1], [], []>} : vector<8x64xbf16>, vector<64x128xbf16>, vector<8x128xf32> -> vector<8x128xf32>
    %100 = vector.broadcast %3 : vector<1x128xf32> to vector<8x128xf32>
    %101 = arith.addf %99, %100 : vector<8x128xf32>
    %cst_43 = arith.constant 0.000000e+00 : f32
    %102 = vector.broadcast %cst_43 : f32 to vector<8x64xf32>
    %c0_44 = arith.constant 0 : index
    %c8 = arith.constant 8 : index
    %c0_45 = arith.constant 0 : index
    %103 = vector.load %arg1[%c0_44, %c8, %c0_45] : memref<8x12x256xf32, #tpu.memory_space<vmem>>, vector<8x1x256xf32>
    %104 = vector.shape_cast %103 : vector<8x1x256xf32> to vector<8x256xf32>
    %cst_46 = arith.constant dense<0.000000e+00> : vector<8xf32>
    %105 = vector.multi_reduction <add>, %104, %cst_46 [1] : vector<8x256xf32> to vector<8xf32>
    %106 = vector.shape_cast %105 : vector<8xf32> to vector<8x1xf32>
    %cst_47 = arith.constant 3.906250e-03 : f32
    %107 = vector.broadcast %cst_47 : f32 to vector<8x1xf32>
    %108 = arith.mulf %106, %107 : vector<8x1xf32>
    %109 = vector.extract_strided_slice %0 {offsets = [0, 0], sizes = [1, 64], strides = [1, 1]} : vector<4x64xf32> to vector<1x64xf32>
    %110 = vector.broadcast %108 : vector<8x1xf32> to vector<8x64xf32>
    %111 = vector.broadcast %109 : vector<1x64xf32> to vector<8x64xf32>
    %112 = arith.mulf %110, %111 : vector<8x64xf32>
    %113 = arith.addf %102, %112 : vector<8x64xf32>
    %c0_48 = arith.constant 0 : index
    %c9 = arith.constant 9 : index
    %c0_49 = arith.constant 0 : index
    %114 = vector.load %arg1[%c0_48, %c9, %c0_49] : memref<8x12x256xf32, #tpu.memory_space<vmem>>, vector<8x1x256xf32>
    %115 = vector.shape_cast %114 : vector<8x1x256xf32> to vector<8x256xf32>
    %cst_50 = arith.constant dense<0.000000e+00> : vector<8xf32>
    %116 = vector.multi_reduction <add>, %115, %cst_50 [1] : vector<8x256xf32> to vector<8xf32>
    %117 = vector.shape_cast %116 : vector<8xf32> to vector<8x1xf32>
    %cst_51 = arith.constant 3.906250e-03 : f32
    %118 = vector.broadcast %cst_51 : f32 to vector<8x1xf32>
    %119 = arith.mulf %117, %118 : vector<8x1xf32>
    %120 = vector.extract_strided_slice %0 {offsets = [1, 0], sizes = [1, 64], strides = [1, 1]} : vector<4x64xf32> to vector<1x64xf32>
    %121 = vector.broadcast %119 : vector<8x1xf32> to vector<8x64xf32>
    %122 = vector.broadcast %120 : vector<1x64xf32> to vector<8x64xf32>
    %123 = arith.mulf %121, %122 : vector<8x64xf32>
    %124 = arith.addf %113, %123 : vector<8x64xf32>
    %c0_52 = arith.constant 0 : index
    %c10 = arith.constant 10 : index
    %c0_53 = arith.constant 0 : index
    %125 = vector.load %arg1[%c0_52, %c10, %c0_53] : memref<8x12x256xf32, #tpu.memory_space<vmem>>, vector<8x1x256xf32>
    %126 = vector.shape_cast %125 : vector<8x1x256xf32> to vector<8x256xf32>
    %cst_54 = arith.constant dense<0.000000e+00> : vector<8xf32>
    %127 = vector.multi_reduction <add>, %126, %cst_54 [1] : vector<8x256xf32> to vector<8xf32>
    %128 = vector.shape_cast %127 : vector<8xf32> to vector<8x1xf32>
    %cst_55 = arith.constant 3.906250e-03 : f32
    %129 = vector.broadcast %cst_55 : f32 to vector<8x1xf32>
    %130 = arith.mulf %128, %129 : vector<8x1xf32>
    %131 = vector.extract_strided_slice %0 {offsets = [2, 0], sizes = [1, 64], strides = [1, 1]} : vector<4x64xf32> to vector<1x64xf32>
    %132 = vector.broadcast %130 : vector<8x1xf32> to vector<8x64xf32>
    %133 = vector.broadcast %131 : vector<1x64xf32> to vector<8x64xf32>
    %134 = arith.mulf %132, %133 : vector<8x64xf32>
    %135 = arith.addf %124, %134 : vector<8x64xf32>
    %c0_56 = arith.constant 0 : index
    %c11 = arith.constant 11 : index
    %c0_57 = arith.constant 0 : index
    %136 = vector.load %arg1[%c0_56, %c11, %c0_57] : memref<8x12x256xf32, #tpu.memory_space<vmem>>, vector<8x1x256xf32>
    %137 = vector.shape_cast %136 : vector<8x1x256xf32> to vector<8x256xf32>
    %cst_58 = arith.constant dense<0.000000e+00> : vector<8xf32>
    %138 = vector.multi_reduction <add>, %137, %cst_58 [1] : vector<8x256xf32> to vector<8xf32>
    %139 = vector.shape_cast %138 : vector<8xf32> to vector<8x1xf32>
    %cst_59 = arith.constant 3.906250e-03 : f32
    %140 = vector.broadcast %cst_59 : f32 to vector<8x1xf32>
    %141 = arith.mulf %139, %140 : vector<8x1xf32>
    %142 = vector.extract_strided_slice %0 {offsets = [3, 0], sizes = [1, 64], strides = [1, 1]} : vector<4x64xf32> to vector<1x64xf32>
    %143 = vector.broadcast %141 : vector<8x1xf32> to vector<8x64xf32>
    %144 = vector.broadcast %142 : vector<1x64xf32> to vector<8x64xf32>
    %145 = arith.mulf %143, %144 : vector<8x64xf32>
    %146 = arith.addf %135, %145 : vector<8x64xf32>
    %147 = arith.truncf %146 : vector<8x64xf32> to vector<8x64xbf16>
    %cst_60 = arith.constant dense<0.000000e+00> : vector<8x128xf32>
    %148 = tpu.matmul %147, %1, %cst_60 {dimension_numbers = #tpu.dot_dimension_numbers<[1], [0], [0], [1], [0, 0, 1, 1], [], []>} : vector<8x64xbf16>, vector<64x128xbf16>, vector<8x128xf32> -> vector<8x128xf32>
    %149 = vector.broadcast %3 : vector<1x128xf32> to vector<8x128xf32>
    %150 = arith.addf %148, %149 : vector<8x128xf32>
    %cst_61 = arith.constant 0.000000e+00 : f32
    %151 = vector.broadcast %cst_61 : f32 to vector<8x32xf32>
    %cst_62 = arith.constant 0.000000e+00 : f32
    %152 = vector.broadcast %cst_62 : f32 to vector<8x32xf32>
    %153 = arith.truncf %151 : vector<8x32xf32> to vector<8x32xbf16>
    %cst_63 = arith.constant dense<0.000000e+00> : vector<8x128xf32>
    %154 = tpu.matmul %153, %2, %cst_63 {dimension_numbers = #tpu.dot_dimension_numbers<[1], [0], [0], [1], [0, 0, 1, 1], [], []>} : vector<8x32xbf16>, vector<32x128xbf16>, vector<8x128xf32> -> vector<8x128xf32>
    %155 = arith.addf %52, %154 : vector<8x128xf32>
    %156 = vector.extract_strided_slice %155 {offsets = [0, 0], sizes = [8, 32], strides = [1, 1]} : vector<8x128xf32> to vector<8x32xf32>
    %157 = arith.negf %156 : vector<8x32xf32>
    %158 = math.exp %157 : vector<8x32xf32>
    %cst_64 = arith.constant 1.000000e+00 : f32
    %159 = vector.broadcast %cst_64 : f32 to vector<8x32xf32>
    %160 = arith.addf %159, %158 : vector<8x32xf32>
    %161 = arith.divf %159, %160 : vector<8x32xf32>
    %162 = vector.extract_strided_slice %155 {offsets = [0, 32], sizes = [8, 32], strides = [1, 1]} : vector<8x128xf32> to vector<8x32xf32>
    %163 = arith.negf %162 : vector<8x32xf32>
    %164 = math.exp %163 : vector<8x32xf32>
    %cst_65 = arith.constant 1.000000e+00 : f32
    %165 = vector.broadcast %cst_65 : f32 to vector<8x32xf32>
    %166 = arith.addf %165, %164 : vector<8x32xf32>
    %167 = arith.divf %165, %166 : vector<8x32xf32>
    %168 = vector.extract_strided_slice %155 {offsets = [0, 64], sizes = [8, 32], strides = [1, 1]} : vector<8x128xf32> to vector<8x32xf32>
    %169 = math.tanh %168 : vector<8x32xf32>
    %170 = vector.extract_strided_slice %155 {offsets = [0, 96], sizes = [8, 32], strides = [1, 1]} : vector<8x128xf32> to vector<8x32xf32>
    %171 = arith.negf %170 : vector<8x32xf32>
    %172 = math.exp %171 : vector<8x32xf32>
    %cst_66 = arith.constant 1.000000e+00 : f32
    %173 = vector.broadcast %cst_66 : f32 to vector<8x32xf32>
    %174 = arith.addf %173, %172 : vector<8x32xf32>
    %175 = arith.divf %173, %174 : vector<8x32xf32>
    %176 = arith.mulf %167, %152 : vector<8x32xf32>
    %177 = arith.mulf %161, %169 : vector<8x32xf32>
    %178 = arith.addf %176, %177 : vector<8x32xf32>
    %179 = math.tanh %178 : vector<8x32xf32>
    %180 = arith.mulf %175, %179 : vector<8x32xf32>
    %181 = arith.truncf %180 : vector<8x32xf32> to vector<8x32xbf16>
    %cst_67 = arith.constant dense<0.000000e+00> : vector<8x128xf32>
    %182 = tpu.matmul %181, %2, %cst_67 {dimension_numbers = #tpu.dot_dimension_numbers<[1], [0], [0], [1], [0, 0, 1, 1], [], []>} : vector<8x32xbf16>, vector<32x128xbf16>, vector<8x128xf32> -> vector<8x128xf32>
    %183 = arith.addf %101, %182 : vector<8x128xf32>
    %184 = vector.extract_strided_slice %183 {offsets = [0, 0], sizes = [8, 32], strides = [1, 1]} : vector<8x128xf32> to vector<8x32xf32>
    %185 = arith.negf %184 : vector<8x32xf32>
    %186 = math.exp %185 : vector<8x32xf32>
    %cst_68 = arith.constant 1.000000e+00 : f32
    %187 = vector.broadcast %cst_68 : f32 to vector<8x32xf32>
    %188 = arith.addf %187, %186 : vector<8x32xf32>
    %189 = arith.divf %187, %188 : vector<8x32xf32>
    %190 = vector.extract_strided_slice %183 {offsets = [0, 32], sizes = [8, 32], strides = [1, 1]} : vector<8x128xf32> to vector<8x32xf32>
    %191 = arith.negf %190 : vector<8x32xf32>
    %192 = math.exp %191 : vector<8x32xf32>
    %cst_69 = arith.constant 1.000000e+00 : f32
    %193 = vector.broadcast %cst_69 : f32 to vector<8x32xf32>
    %194 = arith.addf %193, %192 : vector<8x32xf32>
    %195 = arith.divf %193, %194 : vector<8x32xf32>
    %196 = vector.extract_strided_slice %183 {offsets = [0, 64], sizes = [8, 32], strides = [1, 1]} : vector<8x128xf32> to vector<8x32xf32>
    %197 = math.tanh %196 : vector<8x32xf32>
    %198 = vector.extract_strided_slice %183 {offsets = [0, 96], sizes = [8, 32], strides = [1, 1]} : vector<8x128xf32> to vector<8x32xf32>
    %199 = arith.negf %198 : vector<8x32xf32>
    %200 = math.exp %199 : vector<8x32xf32>
    %cst_70 = arith.constant 1.000000e+00 : f32
    %201 = vector.broadcast %cst_70 : f32 to vector<8x32xf32>
    %202 = arith.addf %201, %200 : vector<8x32xf32>
    %203 = arith.divf %201, %202 : vector<8x32xf32>
    %204 = arith.mulf %195, %178 : vector<8x32xf32>
    %205 = arith.mulf %189, %197 : vector<8x32xf32>
    %206 = arith.addf %204, %205 : vector<8x32xf32>
    %207 = math.tanh %206 : vector<8x32xf32>
    %208 = arith.mulf %203, %207 : vector<8x32xf32>
    %209 = arith.truncf %208 : vector<8x32xf32> to vector<8x32xbf16>
    %cst_71 = arith.constant dense<0.000000e+00> : vector<8x128xf32>
    %210 = tpu.matmul %209, %2, %cst_71 {dimension_numbers = #tpu.dot_dimension_numbers<[1], [0], [0], [1], [0, 0, 1, 1], [], []>} : vector<8x32xbf16>, vector<32x128xbf16>, vector<8x128xf32> -> vector<8x128xf32>
    %211 = arith.addf %150, %210 : vector<8x128xf32>
    %212 = vector.extract_strided_slice %211 {offsets = [0, 0], sizes = [8, 32], strides = [1, 1]} : vector<8x128xf32> to vector<8x32xf32>
    %213 = arith.negf %212 : vector<8x32xf32>
    %214 = math.exp %213 : vector<8x32xf32>
    %cst_72 = arith.constant 1.000000e+00 : f32
    %215 = vector.broadcast %cst_72 : f32 to vector<8x32xf32>
    %216 = arith.addf %215, %214 : vector<8x32xf32>
    %217 = arith.divf %215, %216 : vector<8x32xf32>
    %218 = vector.extract_strided_slice %211 {offsets = [0, 32], sizes = [8, 32], strides = [1, 1]} : vector<8x128xf32> to vector<8x32xf32>
    %219 = arith.negf %218 : vector<8x32xf32>
    %220 = math.exp %219 : vector<8x32xf32>
    %cst_73 = arith.constant 1.000000e+00 : f32
    %221 = vector.broadcast %cst_73 : f32 to vector<8x32xf32>
    %222 = arith.addf %221, %220 : vector<8x32xf32>
    %223 = arith.divf %221, %222 : vector<8x32xf32>
    %224 = vector.extract_strided_slice %211 {offsets = [0, 64], sizes = [8, 32], strides = [1, 1]} : vector<8x128xf32> to vector<8x32xf32>
    %225 = math.tanh %224 : vector<8x32xf32>
    %226 = vector.extract_strided_slice %211 {offsets = [0, 96], sizes = [8, 32], strides = [1, 1]} : vector<8x128xf32> to vector<8x32xf32>
    %227 = arith.negf %226 : vector<8x32xf32>
    %228 = math.exp %227 : vector<8x32xf32>
    %cst_74 = arith.constant 1.000000e+00 : f32
    %229 = vector.broadcast %cst_74 : f32 to vector<8x32xf32>
    %230 = arith.addf %229, %228 : vector<8x32xf32>
    %231 = arith.divf %229, %230 : vector<8x32xf32>
    %232 = arith.mulf %223, %206 : vector<8x32xf32>
    %233 = arith.mulf %217, %225 : vector<8x32xf32>
    %234 = arith.addf %232, %233 : vector<8x32xf32>
    %235 = math.tanh %234 : vector<8x32xf32>
    %236 = arith.mulf %231, %235 : vector<8x32xf32>
    %237 = arith.truncf %236 : vector<8x32xf32> to vector<8x32xbf16>
    %c0_75 = arith.constant 0 : index
    %c0_76 = arith.constant 0 : index
    %238 = vector.load %arg6[%c0_75, %c0_76] : memref<32x128xbf16, #tpu.memory_space<vmem>>, vector<32x128xbf16>
    %cst_77 = arith.constant dense<0.000000e+00> : vector<8x128xf32>
    %239 = tpu.matmul %237, %238, %cst_77 {dimension_numbers = #tpu.dot_dimension_numbers<[1], [0], [0], [1], [0, 0, 1, 1], [], []>} : vector<8x32xbf16>, vector<32x128xbf16>, vector<8x128xf32> -> vector<8x128xf32>
    %c0_78 = arith.constant 0 : index
    %c0_79 = arith.constant 0 : index
    %240 = vector.load %arg7[%c0_78, %c0_79] : memref<1x128xf32, #tpu.memory_space<vmem>>, vector<1x128xf32>
    %241 = vector.broadcast %240 : vector<1x128xf32> to vector<8x128xf32>
    %242 = arith.addf %239, %241 : vector<8x128xf32>
    %c0_80 = arith.constant 0 : index
    %c0_81 = arith.constant 0 : index
    %243 = vector.load %arg8[%c0_80, %c0_81] : memref<8x128xf32, #tpu.memory_space<vmem>>, vector<8x128xf32>
    tpu.vector_store %arg8[%c0_80, %c0_81], %242 {strides = array<i32>} : memref<8x128xf32, #tpu.memory_space<vmem>>, vector<8x128xf32>,
    return
  }
  func.func @transform_0(%arg0: i32) -> (i32, i32, i32) {
    %c0_i32 = arith.constant 0 : i32
    %c0_i32_0 = arith.constant 0 : i32
    %c0_i32_1 = arith.constant 0 : i32
    return %arg0, %c0_i32, %c0_i32_0 : i32, i32, i32
  }
  func.func @transform_1(%arg0: i32) -> (i32, i32) {
    %c0_i32 = arith.constant 0 : i32
    %c0_i32_0 = arith.constant 0 : i32
    %c0_i32_1 = arith.constant 0 : i32
    return %c0_i32, %c0_i32_0 : i32, i32
  }
  func.func @transform_2(%arg0: i32) -> (i32, i32) {
    %c0_i32 = arith.constant 0 : i32
    %c0_i32_0 = arith.constant 0 : i32
    %c0_i32_1 = arith.constant 0 : i32
    return %c0_i32, %c0_i32_0 : i32, i32
  }
  func.func @transform_3(%arg0: i32) -> (i32, i32) {
    %c0_i32 = arith.constant 0 : i32
    %c0_i32_0 = arith.constant 0 : i32
    %c0_i32_1 = arith.constant 0 : i32
    return %c0_i32, %c0_i32_0 : i32, i32
  }
  func.func @transform_4(%arg0: i32) -> (i32, i32) {
    %c0_i32 = arith.constant 0 : i32
    %c0_i32_0 = arith.constant 0 : i32
    %c0_i32_1 = arith.constant 0 : i32
    return %c0_i32, %c0_i32_0 : i32, i32
  }
  func.func @transform_5(%arg0: i32) -> (i32, i32) {
    %c0_i32 = arith.constant 0 : i32
    %c0_i32_0 = arith.constant 0 : i32
    %c0_i32_1 = arith.constant 0 : i32
    return %c0_i32, %c0_i32_0 : i32, i32
  }
  func.func @transform_6(%arg0: i32) -> (i32, i32) {
    %c0_i32 = arith.constant 0 : i32
    %c0_i32_0 = arith.constant 0 : i32
    %c0_i32_1 = arith.constant 0 : i32
    return %c0_i32, %c0_i32_0 : i32, i32
  }
  func.func @transform_7(%arg0: i32) -> (i32, i32) {
    %c0_i32 = arith.constant 0 : i32
    %c0_i32_0 = arith.constant 0 : i32
    return %arg0, %c0_i32 : i32, i32
  }
}

</mosaic_0001>

<llo_original>
// kernel: tpu_custom_call.1
$region0: #{tpu_custom_call.1}
  #allocation0 [shape = 'u32[]', space=smem, size = 0x4, offset = 0x4, fixed_abs, tag = 'smem constant byte address 0x4 - core index']
  #allocation1 [shape = 'u32[144,128]{1,0:T(1,128)}', space=vmem, size = 0x12000, scoped, tag = 'internal scratch']
  %s0 = inlined_call_operand.vmem [shape: f32[16,12,256], index: 0, kind: input, shape index: {}]
  %s1 = inlined_call_operand.vmem [shape: f32[4,64], index: 1, kind: input, shape index: {}]
  %s2 = inlined_call_operand.vmem [shape: bf16[64,128], index: 2, kind: input, shape index: {}]
  %s3 = inlined_call_operand.vmem [shape: bf16[32,128], index: 3, kind: input, shape index: {}]
  %s4 = inlined_call_operand.vmem [shape: f32[1,128], index: 4, kind: input, shape index: {}]
  %s5 = inlined_call_operand.vmem [shape: bf16[32,128], index: 5, kind: input, shape index: {}]
  %s6 = inlined_call_operand.vmem [shape: f32[1,128], index: 6, kind: input, shape index: {}]
  %s7 = inlined_call_operand.hbm [shape: f32[16,128], index: 7, kind: output, shape index: {}]
  %s8 = sld [smem:[#allocation0]]
  $region61: #{tpu_custom_call.1} parent=0
    _
  %s10 = ssub.s32 1, %s8
  %s11 = scalar_select 0, %s10, %s8
  $region1: #{tpu_custom_call.1} parent=0
    #allocation2 [shape = 'u8[8192]{0}', space=vmem, size = 0x2000, scoped, tag = 'output window, operand 0']
    #allocation3 [shape = 's32[2]{0}', space=sflag, size = 0x8, scoped, tag = 'scoped memory for tpu_custom_call.1']
    %12 = vsyncpa [#allocation3], 0
    %s13 = scalar_lea.sflag [#allocation3], 1
    %14 = vsyncpa %s13, 0
    loop: start=0, step=1, limit=4
    $region2: #{tpu_custom_call.1} parent=1 // loop_pre_header
      _
    $region3: #{tpu_custom_call.1} parent=1 // loop_header
      %s16 = sphi 0, %s20
      %p17 = scmp.ge.s32.totalorder %s16, 4
      %s26 = sphi 0, %s28
      %s29 = sphi 0, %s26
      %s30 = sphi 0, %s29
      %s46 = sphi 0, %s30
      %s50 = sphi 0, %s50
      %s52 = sphi 0, %s50
      %s53 = sphi 0, %s52
      %s67 = sphi 0, %s53
      %s71 = sphi 0, %s71
      %s73 = sphi 0, %s71
      %s74 = sphi 0, %s73
      %s88 = sphi 0, %s74
      %s92 = sphi 0, %s92
      %s94 = sphi 0, %s92
      %s95 = sphi 0, %s94
      %s109 = sphi 0, %s95
      %s113 = sphi 0, %s113
      %s115 = sphi 0, %s113
      %s116 = sphi 0, %s115
      %s130 = sphi 0, %s116
      %s134 = sphi 0, %s134
      %s136 = sphi 0, %s134
      %s137 = sphi 0, %s136
      %s151 = sphi 0, %s137
      %s155 = sphi 0, %s155
      %s157 = sphi 0, %s155
      %s158 = sphi 0, %s157
      %s172 = sphi 0, %s158
      %s178 = sphi 0, %s180
      %s181 = sphi 0, %s178
      %s182 = sphi 0, %s181
      %s198 = sphi 0, %s182
    $region4: #{tpu_custom_call.1} parent=1 // loop_header_branch
      %19 = sbr.rel (%p17) target = $region8
    $region5: #{tpu_custom_call.1} parent=1 // loop_body
      %s21 = ssub.s32 %s16, 1
      %s22 = ssub.s32 %s16, 2
      %s23 = sadd.s32 %s16, 1
      %s24 = ssub.s32 %s16, %s23
      %p25 = scmp.eq.s32.totalorder %s24, 0
      %s27 = sadd.s32 %s26, 1
      %s28 = scalar_select %p25, %s26, %s27
      %p31 = pneg %p25
      %p32 = scmp.eq.s32.totalorder %s16, 1
      %p33 = por %p31, %p32
      %p34 = scmp.ne.s32.totalorder %s26, %s29
      %p35 = scmp.eq.s32.totalorder %s16, 0
      %p36 = por %p34, %p35
      %p37 = scmp.ne.s32.totalorder %s26, %s29
      %p38 = scmp.eq.s32.totalorder %s21, 1
      %p39 = por %p37, %p38
      %p40 = scmp.ne.s32.totalorder %s29, %s30
      %p41 = scmp.eq.s32.totalorder %s21, 0
      %p42 = por %p40, %p41
      %p43 = scmp.ne.s32.totalorder %s29, %s30
      %p44 = scmp.eq.s32.totalorder %s22, 1
      %p45 = por %p43, %p44
      %p47 = scmp.ne.s32.totalorder %s30, %s46
      %p48 = scmp.eq.s32.totalorder %s22, 0
      %p49 = por %p47, %p48
      %s51 = sadd.s32 %s50, 1
      %p54 = scmp.eq.s32.totalorder %s16, 1
      %p55 = scmp.ne.s32.totalorder %s50, %s52
      %p56 = scmp.eq.s32.totalorder %s16, 0
      %p57 = por %p55, %p56
      %p58 = scmp.ne.s32.totalorder %s50, %s52
      %p59 = scmp.eq.s32.totalorder %s21, 1
      %p60 = por %p58, %p59
      %p61 = scmp.ne.s32.totalorder %s52, %s53
      %p62 = scmp.eq.s32.totalorder %s21, 0
      %p63 = por %p61, %p62
      %p64 = scmp.ne.s32.totalorder %s52, %s53
      %p65 = scmp.eq.s32.totalorder %s22, 1
      %p66 = por %p64, %p65
      %p68 = scmp.ne.s32.totalorder %s53, %s67
      %p69 = scmp.eq.s32.totalorder %s22, 0
      %p70 = por %p68, %p69
      %s72 = sadd.s32 %s71, 1
      %p75 = scmp.eq.s32.totalorder %s16, 1
      %p76 = scmp.ne.s32.totalorder %s71, %s73
      %p77 = scmp.eq.s32.totalorder %s16, 0
      %p78 = por %p76, %p77
      %p79 = scmp.ne.s32.totalorder %s71, %s73
      %p80 = scmp.eq.s32.totalorder %s21, 1
      %p81 = por %p79, %p80
      %p82 = scmp.ne.s32.totalorder %s73, %s74
      %p83 = scmp.eq.s32.totalorder %s21, 0
      %p84 = por %p82, %p83
      %p85 = scmp.ne.s32.totalorder %s73, %s74
      %p86 = scmp.eq.s32.totalorder %s22, 1
      %p87 = por %p85, %p86
      %p89 = scmp.ne.s32.totalorder %s74, %s88
      %p90 = scmp.eq.s32.totalorder %s22, 0
      %p91 = por %p89, %p90
      %s93 = sadd.s32 %s92, 1
      %p96 = scmp.eq.s32.totalorder %s16, 1
      %p97 = scmp.ne.s32.totalorder %s92, %s94
      %p98 = scmp.eq.s32.totalorder %s16, 0
      %p99 = por %p97, %p98
      %p100 = scmp.ne.s32.totalorder %s92, %s94
      %p101 = scmp.eq.s32.totalorder %s21, 1
      %p102 = por %p100, %p101
      %p103 = scmp.ne.s32.totalorder %s94, %s95
      %p104 = scmp.eq.s32.totalorder %s21, 0
      %p105 = por %p103, %p104
      %p106 = scmp.ne.s32.totalorder %s94, %s95
      %p107 = scmp.eq.s32.totalorder %s22, 1
      %p108 = por %p106, %p107
      %p110 = scmp.ne.s32.totalorder %s95, %s109
      %p111 = scmp.eq.s32.totalorder %s22, 0
      %p112 = por %p110, %p111
      %s114 = sadd.s32 %s113, 1
      %p117 = scmp.eq.s32.totalorder %s16, 1
      %p118 = scmp.ne.s32.totalorder %s113, %s115
      %p119 = scmp.eq.s32.totalorder %s16, 0
      %p120 = por %p118, %p119
      %p121 = scmp.ne.s32.totalorder %s113, %s115
      %p122 = scmp.eq.s32.totalorder %s21, 1
      %p123 = por %p121, %p122
      %p124 = scmp.ne.s32.totalorder %s115, %s116
      %p125 = scmp.eq.s32.totalorder %s21, 0
      %p126 = por %p124, %p125
      %p127 = scmp.ne.s32.totalorder %s115, %s116
      %p128 = scmp.eq.s32.totalorder %s22, 1
      %p129 = por %p127, %p128
      %p131 = scmp.ne.s32.totalorder %s116, %s130
      %p132 = scmp.eq.s32.totalorder %s22, 0
      %p133 = por %p131, %p132
      %s135 = sadd.s32 %s134, 1
      %p138 = scmp.eq.s32.totalorder %s16, 1
      %p139 = scmp.ne.s32.totalorder %s134, %s136
      %p140 = scmp.eq.s32.totalorder %s16, 0
      %p141 = por %p139, %p140
      %p142 = scmp.ne.s32.totalorder %s134, %s136
      %p143 = scmp.eq.s32.totalorder %s21, 1
      %p144 = por %p142, %p143
      %p145 = scmp.ne.s32.totalorder %s136, %s137
      %p146 = scmp.eq.s32.totalorder %s21, 0
      %p147 = por %p145, %p146
      %p148 = scmp.ne.s32.totalorder %s136, %s137
      %p149 = scmp.eq.s32.totalorder %s22, 1
      %p150 = por %p148, %p149
      %p152 = scmp.ne.s32.totalorder %s137, %s151
      %p153 = scmp.eq.s32.totalorder %s22, 0
      %p154 = por %p152, %p153
      %s156 = sadd.s32 %s155, 1
      %p159 = scmp.eq.s32.totalorder %s16, 1
      %p160 = scmp.ne.s32.totalorder %s155, %s157
      %p161 = scmp.eq.s32.totalorder %s16, 0
      %p162 = por %p160, %p161
      %p163 = scmp.ne.s32.totalorder %s155, %s157
      %p164 = scmp.eq.s32.totalorder %s21, 1
      %p165 = por %p163, %p164
      %p166 = scmp.ne.s32.totalorder %s157, %s158
      %p167 = scmp.eq.s32.totalorder %s21, 0
      %p168 = por %p166, %p167
      %p169 = scmp.ne.s32.totalorder %s157, %s158
      %p170 = scmp.eq.s32.totalorder %s22, 1
      %p171 = por %p169, %p170
      %p173 = scmp.ne.s32.totalorder %s158, %s172
      %p174 = scmp.eq.s32.totalorder %s22, 0
      %p175 = por %p173, %p174
      %s176 = ssub.s32 %s16, %s23
      %p177 = scmp.eq.s32.totalorder %s176, 0
      %s179 = sadd.s32 %s178, 1
      %s180 = scalar_select %p177, %s178, %s179
      %p183 = pneg %p177
      %p184 = scmp.eq.s32.totalorder %s16, 1
      %p185 = por %p183, %p184
      %p186 = scmp.ne.s32.totalorder %s178, %s181
      %p187 = scmp.eq.s32.totalorder %s16, 0
      %p188 = por %p186, %p187
      %p189 = scmp.ne.s32.totalorder %s178, %s181
      %p190 = scmp.eq.s32.totalorder %s21, 1
      %p191 = por %p189, %p190
      %p192 = scmp.ne.s32.totalorder %s181, %s182
      %p193 = scmp.eq.s32.totalorder %s21, 0
      %p194 = por %p192, %p193
      %p195 = scmp.ne.s32.totalorder %s181, %s182
      %p196 = scmp.eq.s32.totalorder %s22, 1
      %p197 = por %p195, %p196
      %p199 = scmp.ne.s32.totalorder %s182, %s198
      %p200 = scmp.eq.s32.totalorder %s22, 0
      %p201 = por %p199, %p200
      %p202 = scmp.le.s32.totalorder 1, %s16
      %p203 = scmp.lt.s32.totalorder %s16, 3
      %p204 = pnand %p202, %p203
      %p205 = pneg %p204
      // Predicated region
      $region9: #{tpu_custom_call.1} parent=5 // pred_check
        _
      $region10: #{tpu_custom_call.1} parent=5 // pred_check_branch
        %207 = sbr.rel (%p204) target = $region12
      $region11: #{tpu_custom_call.1} parent=5 // pred_region
        %s208 = ssub.s32 %s16, 1
        // Predicated region
        $region13: #{tpu_custom_call.1} parent=11 // pred_check
          %p209 = pneg %p63
        $region14: #{tpu_custom_call.1} parent=11 // pred_check_branch
          %211 = sbr.rel (%p209) target = $region16
        $region15: #{tpu_custom_call.1} parent=11 // pred_region
          _
        $region16: #{tpu_custom_call.1} parent=11 // pred_fallthru
          _
        // Predicated region
        $region17: #{tpu_custom_call.1} parent=11 // pred_check
          %p212 = pneg %p84
        $region18: #{tpu_custom_call.1} parent=11 // pred_check_branch
          %214 = sbr.rel (%p212) target = $region20
        $region19: #{tpu_custom_call.1} parent=11 // pred_region
          _
        $region20: #{tpu_custom_call.1} parent=11 // pred_fallthru
          _
        // Predicated region
        $region21: #{tpu_custom_call.1} parent=11 // pred_check
          %p215 = pneg %p105
        $region22: #{tpu_custom_call.1} parent=11 // pred_check_branch
          %217 = sbr.rel (%p215) target = $region24
        $region23: #{tpu_custom_call.1} parent=11 // pred_region
          _
        $region24: #{tpu_custom_call.1} parent=11 // pred_fallthru
          _
        // Predicated region
        $region25: #{tpu_custom_call.1} parent=11 // pred_check
          %p218 = pneg %p126
        $region26: #{tpu_custom_call.1} parent=11 // pred_check_branch
          %220 = sbr.rel (%p218) target = $region28
        $region27: #{tpu_custom_call.1} parent=11 // pred_region
          _
        $region28: #{tpu_custom_call.1} parent=11 // pred_fallthru
          _
        // Predicated region
        $region29: #{tpu_custom_call.1} parent=11 // pred_check
          %p221 = pneg %p147
        $region30: #{tpu_custom_call.1} parent=11 // pred_check_branch
          %223 = sbr.rel (%p221) target = $region32
        $region31: #{tpu_custom_call.1} parent=11 // pred_region
          _
        $region32: #{tpu_custom_call.1} parent=11 // pred_fallthru
          _
        // Predicated region
        $region33: #{tpu_custom_call.1} parent=11 // pred_check
          %p224 = pneg %p168
        $region34: #{tpu_custom_call.1} parent=11 // pred_check_branch
          %226 = sbr.rel (%p224) target = $region36
        $region35: #{tpu_custom_call.1} parent=11 // pred_region
          _
        $region36: #{tpu_custom_call.1} parent=11 // pred_fallthru
          _
      $region12: #{tpu_custom_call.1} parent=5 // pred_fallthru
        _
      %p227 = scmp.lt.s32.totalorder %s16, 2
      // Predicated region
      $region37: #{tpu_custom_call.1} parent=5 // pred_check
        %p228 = pneg %p227
      $region38: #{tpu_custom_call.1} parent=5 // pred_check_branch
        %230 = sbr.rel (%p228) target = $region40
      $region39: #{tpu_custom_call.1} parent=5 // pred_region
        // Predicated region
        $region41: #{tpu_custom_call.1} parent=39 // pred_check
          %p231 = pneg %p36
        $region42: #{tpu_custom_call.1} parent=39 // pred_check_branch
          %233 = sbr.rel (%p231) target = $region44
        $region43: #{tpu_custom_call.1} parent=39 // pred_region
          %s234 = smul.u32 8, %s16
          %p235 = scmp.lt.s32.totalorder %s234, 15
          %s236 = scalar_select %p235, %s234, 15
          %s237 = smul.addr %s236, 4
          %s238 = smul.addr %s237, 8
          %s239 = scalar_lea.vmem %s0, %s238
          %s240 = smul.u32 8, %s16
        $region44: #{tpu_custom_call.1} parent=39 // pred_fallthru
          _
      $region40: #{tpu_custom_call.1} parent=5 // pred_fallthru
        _
      %p241 = scmp.le.s32.totalorder 1, %s16
      %p242 = scmp.lt.s32.totalorder %s16, 3
      %p243 = pnand %p241, %p242
      %p244 = pneg %p243
      // Predicated region
      $region45: #{tpu_custom_call.1} parent=5 // pred_check
        _
      $region46: #{tpu_custom_call.1} parent=5 // pred_check_branch
        %246 = sbr.rel (%p243) target = $region48
      $region47: #{tpu_custom_call.1} parent=5 // pred_region
        %s247 = ssub.s32 %s16, 1
        %s248 = smul.u32 8, %s21
        %p249 = scmp.lt.s32.totalorder %s248, 15
        %s250 = scalar_select %p249, %s248, 15
        %s251 = smul.addr %s250, 4
        %s252 = smul.addr %s251, 8
        %s253 = scalar_lea.vmem %s0, %s252
        %p254 = pneg %p42
        %p255 = pneg %p39
        %p256 = pneg %p63
        %p257 = pneg %p60
        %p258 = pneg %p84
        %p259 = pneg %p81
        %p260 = pneg %p105
        %p261 = pneg %p102
        %p262 = pneg %p126
        %p263 = pneg %p123
        %p264 = pneg %p147
        %p265 = pneg %p144
        %p266 = pneg %p168
        %p267 = pneg %p165
        %p268 = pneg %p194
        %p269 = pneg %p191
        %s270 = sand.u32 %s181, 1
        %s271 = scalar_lea.sflag [#allocation3], %s270
        %s272 = sand.u32 %s181, 1
        %s273 = smul.addr %s272, 8
        %s274 = scalar_lea.vmem [#allocation2], %s273
        %s275 = smul.u32 8, %s21
        %p276 = scmp.lt.s32.totalorder %s275, 15
        %s277 = scalar_select %p276, %s275, 15
        %s278 = smul.addr %s277, 4
        %s279 = smul.addr %s278, 8
        %s280 = scalar_lea.vmem %s0, %s279
        %s281 = smul.u32 8, %s21
        %v283 = vld [vmem:[%s1] sm:$0xf]
        %v284 = vld [vmem:[%s2] sm:$0xf]
        %v285 = vld [vmem:[%s2 + $0x4] sm:$0xf]
        %v286 = vld [vmem:[%s2 + $0x8] sm:$0xf]
        %v287 = vld [vmem:[%s2 + $0xc] sm:$0xf]
        %v288 = vld [vmem:[%s2 + $0x10] sm:$0xf]
        %v289 = vld [vmem:[%s2 + $0x14] sm:$0xf]
        %v290 = vld [vmem:[%s2 + $0x18] sm:$0xf]
        %v291 = vld [vmem:[%s2 + $0x1c] sm:$0xf]
        %v292 = vld [vmem:[%s3] sm:$0xf]
        %v293 = vld [vmem:[%s3 + $0x4] sm:$0xf]
        %v294 = vld [vmem:[%s3 + $0x8] sm:$0xf]
        %v295 = vld [vmem:[%s3 + $0xc] sm:$0xf]
        %v296 = vld [vmem:[%s4] sm:$0x1]
        %v297 = vld [vmem:[%s280] ss:$8 sm:$0x3]
        %s298 = scalar_lea.vmem %s280, 32
        %v299 = vld [vmem:[%s298] ss:$8 sm:$0x3]
        %s300 = scalar_lea.vmem %s280, 64
        %v301 = vld [vmem:[%s300] ss:$8 sm:$0x3]
        %s302 = scalar_lea.vmem %s280, 96
        %v303 = vld [vmem:[%s302] ss:$8 sm:$0x3]
        %s304 = scalar_lea.vmem %s280, 128
        %v305 = vld [vmem:[%s304] ss:$8 sm:$0x3]
        %s306 = scalar_lea.vmem %s280, 160
        %v307 = vld [vmem:[%s306] ss:$8 sm:$0x3]
        %s308 = scalar_lea.vmem %s280, 192
        %v309 = vld [vmem:[%s308] ss:$8 sm:$0x3]
        %s310 = scalar_lea.vmem %s280, 224
        %v311 = vld [vmem:[%s310] ss:$8 sm:$0x3]
        %v320 = vcombine.low %v297, %v299
        %v321 = vcombine.low %v301, %v303
        %v322 = vcombine.low %v305, %v307
        %v323 = vcombine.low %v309, %v311
        %v325 = vunpack.c.l.s4 1966171168
        %v326 = vunpack.c.0.s8 %v325
        %v327 = vlaneseq
        %v328 = vshrl.u32 %v327, 7
        %v329 = vsub.s32 %v326, %v328
        %v330 = vrot.slane %v320, %v329
        %v332 = vunpack.c.l.s4 1966171168
        %v333 = vunpack.c.0.s8 %v332
        %v334 = vlaneseq
        %v335 = vshrl.u32 %v334, 7
        %v336 = vsub.s32 %v333, %v335
        %v337 = vrot.slane %v321, %v336
        %v339 = vunpack.c.l.s4 1966171168
        %v340 = vunpack.c.0.s8 %v339
        %v341 = vlaneseq
        %v342 = vshrl.u32 %v341, 7
        %v343 = vsub.s32 %v340, %v342
        %v344 = vrot.slane %v322, %v343
        %v346 = vunpack.c.l.s4 1966171168
        %v347 = vunpack.c.0.s8 %v346
        %v348 = vlaneseq
        %v349 = vshrl.u32 %v348, 7
        %v350 = vsub.s32 %v347, %v349
        %v351 = vrot.slane %v323, %v350
        %v352 = vcombine.low %v330, %v337
        %v353 = vcombine.high %v330, %v337
        %v354 = vcombine.low %v344, %v351
        %v355 = vcombine.high %v344, %v351
        %v357 = vunpack.c.l.s4 1966171168
        %v358 = vunpack.c.0.s8 %v357
        %v359 = vlaneseq
        %v360 = vshrl.u32 %v359, 7
        %v361 = vsub.s32 %v358, %v360
        %v362 = vrot.slane %v352, %v361
        %v364 = vunpack.c.l.s4 1966171168
        %v365 = vunpack.c.0.s8 %v364
        %v366 = vlaneseq
        %v367 = vshrl.u32 %v366, 7
        %v368 = vsub.s32 %v365, %v367
        %v369 = vrot.slane %v353, %v368
        %v371 = vunpack.c.l.s4 1966171168
        %v372 = vunpack.c.0.s8 %v371
        %v373 = vlaneseq
        %v374 = vshrl.u32 %v373, 7
        %v375 = vsub.s32 %v372, %v374
        %v376 = vrot.slane %v354, %v375
        %v378 = vunpack.c.l.s4 1966171168
        %v379 = vunpack.c.0.s8 %v378
        %v380 = vlaneseq
        %v381 = vshrl.u32 %v380, 7
        %v382 = vsub.s32 %v379, %v381
        %v383 = vrot.slane %v355, %v382
        %v384 = vcombine.low %v362, %v376
        %v385 = vcombine.low %v369, %v383
        %v388 = vadd.f32 %v384, %v385
        %389 = vadd.xlane.f32.xlu0 %v388
        %v390 = vpop.xlane.xlu0 %389
        %v391 = vmul.f32 %v390, 0.00390625
        %v392 = vlaneseq
        %v393 = vshrl.u32 %v392, 7
        %v394 = vsub.s32 0, %v393
        %v395 = vrot.slane %v283, %v394
        %v396 = vmul.f32 %v391, %v395
        %v397 = vadd.f32 %v396, 0.0
        %s398 = scalar_lea.vmem %s280, 1
        %v399 = vld [vmem:[%s398] ss:$8 sm:$0x3]
        %s400 = scalar_lea.vmem %s280, 33
        %v401 = vld [vmem:[%s400] ss:$8 sm:$0x3]
        %s402 = scalar_lea.vmem %s280, 65
        %v403 = vld [vmem:[%s402] ss:$8 sm:$0x3]
        %s404 = scalar_lea.vmem %s280, 97
        %v405 = vld [vmem:[%s404] ss:$8 sm:$0x3]
        %s406 = scalar_lea.vmem %s280, 129
        %v407 = vld [vmem:[%s406] ss:$8 sm:$0x3]
        %s408 = scalar_lea.vmem %s280, 161
        %v409 = vld [vmem:[%s408] ss:$8 sm:$0x3]
        %s410 = scalar_lea.vmem %s280, 193
        %v411 = vld [vmem:[%s410] ss:$8 sm:$0x3]
        %s412 = scalar_lea.vmem %s280, 225
        %v413 = vld [vmem:[%s412] ss:$8 sm:$0x3]
        %v422 = vcombine.low %v399, %v401
        %v423 = vcombine.low %v403, %v405
        %v424 = vcombine.low %v407, %v409
        %v425 = vcombine.low %v411, %v413
        %v427 = vunpack.c.l.s4 1966171168
        %v428 = vunpack.c.0.s8 %v427
        %v429 = vlaneseq
        %v430 = vshrl.u32 %v429, 7
        %v431 = vsub.s32 %v428, %v430
        %v432 = vrot.slane %v422, %v431
        %v434 = vunpack.c.l.s4 1966171168
        %v435 = vunpack.c.0.s8 %v434
        %v436 = vlaneseq
        %v437 = vshrl.u32 %v436, 7
        %v438 = vsub.s32 %v435, %v437
        %v439 = vrot.slane %v423, %v438
        %v441 = vunpack.c.l.s4 1966171168
        %v442 = vunpack.c.0.s8 %v441
        %v443 = vlaneseq
        %v444 = vshrl.u32 %v443, 7
        %v445 = vsub.s32 %v442, %v444
        %v446 = vrot.slane %v424, %v445
        %v448 = vunpack.c.l.s4 1966171168
        %v449 = vunpack.c.0.s8 %v448
        %v450 = vlaneseq
        %v451 = vshrl.u32 %v450, 7
        %v452 = vsub.s32 %v449, %v451
        %v453 = vrot.slane %v425, %v452
        %v454 = vcombine.low %v432, %v439
        %v455 = vcombine.high %v432, %v439
        %v456 = vcombine.low %v446, %v453
        %v457 = vcombine.high %v446, %v453
        %v459 = vunpack.c.l.s4 1966171168
        %v460 = vunpack.c.0.s8 %v459
        %v461 = vlaneseq
        %v462 = vshrl.u32 %v461, 7
        %v463 = vsub.s32 %v460, %v462
        %v464 = vrot.slane %v454, %v463
        %v466 = vunpack.c.l.s4 1966171168
        %v467 = vunpack.c.0.s8 %v466
        %v468 = vlaneseq
        %v469 = vshrl.u32 %v468, 7
        %v470 = vsub.s32 %v467, %v469
        %v471 = vrot.slane %v455, %v470
        %v473 = vunpack.c.l.s4 1966171168
        %v474 = vunpack.c.0.s8 %v473
        %v475 = vlaneseq
        %v476 = vshrl.u32 %v475, 7
        %v477 = vsub.s32 %v474, %v476
        %v478 = vrot.slane %v456, %v477
        %v480 = vunpack.c.l.s4 1966171168
        %v481 = vunpack.c.0.s8 %v480
        %v482 = vlaneseq
        %v483 = vshrl.u32 %v482, 7
        %v484 = vsub.s32 %v481, %v483
        %v485 = vrot.slane %v457, %v484
        %v486 = vcombine.low %v464, %v478
        %v487 = vcombine.low %v471, %v485
        %v490 = vadd.f32 %v486, %v487
        %491 = vadd.xlane.f32.xlu0 %v490
        %v492 = vpop.xlane.xlu0 %491
        %v493 = vmul.f32 %v492, 0.00390625
        %v494 = vlaneseq
        %v495 = vshrl.u32 %v494, 7
        %v496 = vsub.s32 1, %v495
        %v497 = vrot.slane %v283, %v496
        %v498 = vmul.f32 %v493, %v497
        %v499 = vadd.f32 %v397, %v498
        %s500 = scalar_lea.vmem %s280, 2
        %v501 = vld [vmem:[%s500] ss:$8 sm:$0x3]
        %s502 = scalar_lea.vmem %s280, 34
        %v503 = vld [vmem:[%s502] ss:$8 sm:$0x3]
        %s504 = scalar_lea.vmem %s280, 66
        %v505 = vld [vmem:[%s504] ss:$8 sm:$0x3]
        %s506 = scalar_lea.vmem %s280, 98
        %v507 = vld [vmem:[%s506] ss:$8 sm:$0x3]
        %s508 = scalar_lea.vmem %s280, 130
        %v509 = vld [vmem:[%s508] ss:$8 sm:$0x3]
        %s510 = scalar_lea.vmem %s280, 162
        %v511 = vld [vmem:[%s510] ss:$8 sm:$0x3]
        %s512 = scalar_lea.vmem %s280, 194
        %v513 = vld [vmem:[%s512] ss:$8 sm:$0x3]
        %s514 = scalar_lea.vmem %s280, 226
        %v515 = vld [vmem:[%s514] ss:$8 sm:$0x3]
        %v524 = vcombine.low %v501, %v503
        %v525 = vcombine.low %v505, %v507
        %v526 = vcombine.low %v509, %v511
        %v527 = vcombine.low %v513, %v515
        %v529 = vunpack.c.l.s4 1966171168
        %v530 = vunpack.c.0.s8 %v529
        %v531 = vlaneseq
        %v532 = vshrl.u32 %v531, 7
        %v533 = vsub.s32 %v530, %v532
        %v534 = vrot.slane %v524, %v533
        %v536 = vunpack.c.l.s4 1966171168
        %v537 = vunpack.c.0.s8 %v536
        %v538 = vlaneseq
        %v539 = vshrl.u32 %v538, 7
        %v540 = vsub.s32 %v537, %v539
        %v541 = vrot.slane %v525, %v540
        %v543 = vunpack.c.l.s4 1966171168
        %v544 = vunpack.c.0.s8 %v543
        %v545 = vlaneseq
        %v546 = vshrl.u32 %v545, 7
        %v547 = vsub.s32 %v544, %v546
        %v548 = vrot.slane %v526, %v547
        %v550 = vunpack.c.l.s4 1966171168
        %v551 = vunpack.c.0.s8 %v550
        %v552 = vlaneseq
        %v553 = vshrl.u32 %v552, 7
        %v554 = vsub.s32 %v551, %v553
        %v555 = vrot.slane %v527, %v554
        %v556 = vcombine.low %v534, %v541
        %v557 = vcombine.high %v534, %v541
        %v558 = vcombine.low %v548, %v555
        %v559 = vcombine.high %v548, %v555
        %v561 = vunpack.c.l.s4 1966171168
        %v562 = vunpack.c.0.s8 %v561
        %v563 = vlaneseq
        %v564 = vshrl.u32 %v563, 7
        %v565 = vsub.s32 %v562, %v564
        %v566 = vrot.slane %v556, %v565
        %v568 = vunpack.c.l.s4 1966171168
        %v569 = vunpack.c.0.s8 %v568
        %v570 = vlaneseq
        %v571 = vshrl.u32 %v570, 7
        %v572 = vsub.s32 %v569, %v571
        %v573 = vrot.slane %v557, %v572
        %v575 = vunpack.c.l.s4 1966171168
        %v576 = vunpack.c.0.s8 %v575
        %v577 = vlaneseq
        %v578 = vshrl.u32 %v577, 7
        %v579 = vsub.s32 %v576, %v578
        %v580 = vrot.slane %v558, %v579
        %v582 = vunpack.c.l.s4 1966171168
        %v583 = vunpack.c.0.s8 %v582
        %v584 = vlaneseq
        %v585 = vshrl.u32 %v584, 7
        %v586 = vsub.s32 %v583, %v585
        %v587 = vrot.slane %v559, %v586
        %v588 = vcombine.low %v566, %v580
        %v589 = vcombine.low %v573, %v587
        %v592 = vadd.f32 %v588, %v589
        %593 = vadd.xlane.f32.xlu0 %v592
        %v594 = vpop.xlane.xlu0 %593
        %v595 = vmul.f32 %v594, 0.00390625
        %v596 = vlaneseq
        %v597 = vshrl.u32 %v596, 7
        %v598 = vsub.s32 2, %v597
        %v599 = vrot.slane %v283, %v598
        %v600 = vmul.f32 %v595, %v599
        %v601 = vadd.f32 %v499, %v600
        %s602 = scalar_lea.vmem %s280, 3
        %v603 = vld [vmem:[%s602] ss:$8 sm:$0x3]
        %s604 = scalar_lea.vmem %s280, 35
        %v605 = vld [vmem:[%s604] ss:$8 sm:$0x3]
        %s606 = scalar_lea.vmem %s280, 67
        %v607 = vld [vmem:[%s606] ss:$8 sm:$0x3]
        %s608 = scalar_lea.vmem %s280, 99
        %v609 = vld [vmem:[%s608] ss:$8 sm:$0x3]
        %s610 = scalar_lea.vmem %s280, 131
        %v611 = vld [vmem:[%s610] ss:$8 sm:$0x3]
        %s612 = scalar_lea.vmem %s280, 163
        %v613 = vld [vmem:[%s612] ss:$8 sm:$0x3]
        %s614 = scalar_lea.vmem %s280, 195
        %v615 = vld [vmem:[%s614] ss:$8 sm:$0x3]
        %s616 = scalar_lea.vmem %s280, 227
        %v617 = vld [vmem:[%s616] ss:$8 sm:$0x3]
        %v626 = vcombine.low %v603, %v605
        %v627 = vcombine.low %v607, %v609
        %v628 = vcombine.low %v611, %v613
        %v629 = vcombine.low %v615, %v617
        %v631 = vunpack.c.l.s4 1966171168
        %v632 = vunpack.c.0.s8 %v631
        %v633 = vlaneseq
        %v634 = vshrl.u32 %v633, 7
        %v635 = vsub.s32 %v632, %v634
        %v636 = vrot.slane %v626, %v635
        %v638 = vunpack.c.l.s4 1966171168
        %v639 = vunpack.c.0.s8 %v638
        %v640 = vlaneseq
        %v641 = vshrl.u32 %v640, 7
        %v642 = vsub.s32 %v639, %v641
        %v643 = vrot.slane %v627, %v642
        %v645 = vunpack.c.l.s4 1966171168
        %v646 = vunpack.c.0.s8 %v645
        %v647 = vlaneseq
        %v648 = vshrl.u32 %v647, 7
        %v649 = vsub.s32 %v646, %v648
        %v650 = vrot.slane %v628, %v649
        %v652 = vunpack.c.l.s4 1966171168
        %v653 = vunpack.c.0.s8 %v652
        %v654 = vlaneseq
        %v655 = vshrl.u32 %v654, 7
        %v656 = vsub.s32 %v653, %v655
        %v657 = vrot.slane %v629, %v656
        %v658 = vcombine.low %v636, %v643
        %v659 = vcombine.high %v636, %v643
        %v660 = vcombine.low %v650, %v657
        %v661 = vcombine.high %v650, %v657
        %v663 = vunpack.c.l.s4 1966171168
        %v664 = vunpack.c.0.s8 %v663
        %v665 = vlaneseq
        %v666 = vshrl.u32 %v665, 7
        %v667 = vsub.s32 %v664, %v666
        %v668 = vrot.slane %v658, %v667
        %v670 = vunpack.c.l.s4 1966171168
        %v671 = vunpack.c.0.s8 %v670
        %v672 = vlaneseq
        %v673 = vshrl.u32 %v672, 7
        %v674 = vsub.s32 %v671, %v673
        %v675 = vrot.slane %v659, %v674
        %v677 = vunpack.c.l.s4 1966171168
        %v678 = vunpack.c.0.s8 %v677
        %v679 = vlaneseq
        %v680 = vshrl.u32 %v679, 7
        %v681 = vsub.s32 %v678, %v680
        %v682 = vrot.slane %v660, %v681
        %v684 = vunpack.c.l.s4 1966171168
        %v685 = vunpack.c.0.s8 %v684
        %v686 = vlaneseq
        %v687 = vshrl.u32 %v686, 7
        %v688 = vsub.s32 %v685, %v687
        %v689 = vrot.slane %v661, %v688
        %v690 = vcombine.low %v668, %v682
        %v691 = vcombine.low %v675, %v689
        %v694 = vadd.f32 %v690, %v691
        %695 = vadd.xlane.f32.xlu0 %v694
        %v696 = vpop.xlane.xlu0 %695
        %v697 = vmul.f32 %v696, 0.00390625
        %v698 = vlaneseq
        %v699 = vshrl.u32 %v698, 7
        %v700 = vsub.s32 3, %v699
        %v701 = vrot.slane %v283, %v700
        %v702 = vmul.f32 %v697, %v701
        %v703 = vadd.f32 %v601, %v702
        %v704 = vpack.c.bf16 %v703, %v703
        %v706 = vlaneseq
        %v707 = vshrl.u32 %v706, 7
        %v708 = vsub.s32 0, %v707
        %v709 = vrot.slane %v296, %v708
        %v719 = vunpack.c.l.b16 %v284
        %v720 = vunpack.c.l.b16 %v285
        %v721 = vunpack.c.l.b16 %v286
        %v722 = vunpack.c.l.b16 %v287
        %v723 = vunpack.c.l.b16 %v288
        %v724 = vunpack.c.l.b16 %v289
        %v725 = vunpack.c.l.b16 %v290
        %v726 = vunpack.c.l.b16 %v291
        %v727 = vpack.c.b16 %v720, %v719
        %v728 = vpack.c.b16 %v722, %v721
        %v729 = vpack.c.b16 %v724, %v723
        %v730 = vpack.c.b16 %v726, %v725
        %vm735 = vcmask 523264
        %v737 = vsel %vm735, %v704, 0
        %739 = vmatprep.subr.bf16.mxu0 0
        %740 = vmatpush1.bf16.msra.mxu0 %v727
        %741 = vmatprep.subr.bf16.mxu0 0
        %742 = vmatpush1.bf16.msra.mxu0 %v728
        %743 = vmatprep.subr.bf16.mxu0 0
        %744 = vmatpush1.bf16.msra.mxu0 %v729
        %745 = vmatprep.subr.bf16.mxu0 0
        %746 = vmatpush1.bf16.msra.mxu0 %v730
        %747 = vmatprep.subr.bf16.mxu0 0
        %748 = vmatpush1.bf16.msra.mxu0 0
        %749 = vmatprep.subr.bf16.mxu0 0
        %750 = vmatpush1.bf16.msra.mxu0 0
        %751 = vmatprep.subr.bf16.mxu0 0
        %752 = vmatpush1.bf16.msra.mxu0 0
        %753 = vmatprep.subr.bf16.mxu0 0
        %754 = vmatpush1.bf16.msra.mxu0 0
        %755 = vmatprep.subr.bf16.mxu0 0
        %756 = vmatpush1.bf16.msra.mxu0 0
        %757 = vmatprep.subr.bf16.mxu0 0
        %758 = vmatpush1.bf16.msra.mxu0 0
        %759 = vmatprep.subr.bf16.mxu0 0
        %760 = vmatpush1.bf16.msra.mxu0 0
        %761 = vmatprep.subr.bf16.mxu0 0
        %762 = vmatpush1.bf16.msra.mxu0 0
        %763 = vmatprep.subr.bf16.mxu0 0
        %764 = vmatpush1.bf16.msra.mxu0 0
        %765 = vmatprep.subr.bf16.mxu0 0
        %766 = vmatpush1.bf16.msra.mxu0 0
        %767 = vmatprep.subr.bf16.mxu0 0
        %768 = vmatpush1.bf16.msra.mxu0 0
        %769 = vmatprep.subr.bf16.mxu0 0
        %770 = vmatpush1.bf16.msra.mxu0 0
        %771 = vmatprep.mubr.bf16.mxu0 0
        %772 = vmatmul.mubr.bf16.gmra.mrb[0].mxu0 %v737
        %v773 = vpop.f32.mrb[0].mxu0
        %v774 = vadd.f32 %v709, %v773
        %v775 = vpop.f32.mrb[0].mxu0
        %v776 = vpop.f32.mrb[0].mxu0
        %v777 = vpop.f32.mrb[0].mxu0
        %778 = vdwg.mxu0
        %s779 = scalar_lea.vmem %s280, 4
        %v780 = vld [vmem:[%s779] ss:$8 sm:$0x3]
        %s781 = scalar_lea.vmem %s280, 36
        %v782 = vld [vmem:[%s781] ss:$8 sm:$0x3]
        %s783 = scalar_lea.vmem %s280, 68
        %v784 = vld [vmem:[%s783] ss:$8 sm:$0x3]
        %s785 = scalar_lea.vmem %s280, 100
        %v786 = vld [vmem:[%s785] ss:$8 sm:$0x3]
        %s787 = scalar_lea.vmem %s280, 132
        %v788 = vld [vmem:[%s787] ss:$8 sm:$0x3]
        %s789 = scalar_lea.vmem %s280, 164
        %v790 = vld [vmem:[%s789] ss:$8 sm:$0x3]
        %s791 = scalar_lea.vmem %s280, 196
        %v792 = vld [vmem:[%s791] ss:$8 sm:$0x3]
        %s793 = scalar_lea.vmem %s280, 228
        %v794 = vld [vmem:[%s793] ss:$8 sm:$0x3]
        %v803 = vcombine.low %v780, %v782
        %v804 = vcombine.low %v784, %v786
        %v805 = vcombine.low %v788, %v790
        %v806 = vcombine.low %v792, %v794
        %v808 = vunpack.c.l.s4 1966171168
        %v809 = vunpack.c.0.s8 %v808
        %v810 = vlaneseq
        %v811 = vshrl.u32 %v810, 7
        %v812 = vsub.s32 %v809, %v811
        %v813 = vrot.slane %v803, %v812
        %v815 = vunpack.c.l.s4 1966171168
        %v816 = vunpack.c.0.s8 %v815
        %v817 = vlaneseq
        %v818 = vshrl.u32 %v817, 7
        %v819 = vsub.s32 %v816, %v818
        %v820 = vrot.slane %v804, %v819
        %v822 = vunpack.c.l.s4 1966171168
        %v823 = vunpack.c.0.s8 %v822
        %v824 = vlaneseq
        %v825 = vshrl.u32 %v824, 7
        %v826 = vsub.s32 %v823, %v825
        %v827 = vrot.slane %v805, %v826
        %v829 = vunpack.c.l.s4 1966171168
        %v830 = vunpack.c.0.s8 %v829
        %v831 = vlaneseq
        %v832 = vshrl.u32 %v831, 7
        %v833 = vsub.s32 %v830, %v832
        %v834 = vrot.slane %v806, %v833
        %v835 = vcombine.low %v813, %v820
        %v836 = vcombine.high %v813, %v820
        %v837 = vcombine.low %v827, %v834
        %v838 = vcombine.high %v827, %v834
        %v840 = vunpack.c.l.s4 1966171168
        %v841 = vunpack.c.0.s8 %v840
        %v842 = vlaneseq
        %v843 = vshrl.u32 %v842, 7
        %v844 = vsub.s32 %v841, %v843
        %v845 = vrot.slane %v835, %v844
        %v847 = vunpack.c.l.s4 1966171168
        %v848 = vunpack.c.0.s8 %v847
        %v849 = vlaneseq
        %v850 = vshrl.u32 %v849, 7
        %v851 = vsub.s32 %v848, %v850
        %v852 = vrot.slane %v836, %v851
        %v854 = vunpack.c.l.s4 1966171168
        %v855 = vunpack.c.0.s8 %v854
        %v856 = vlaneseq
        %v857 = vshrl.u32 %v856, 7
        %v858 = vsub.s32 %v855, %v857
        %v859 = vrot.slane %v837, %v858
        %v861 = vunpack.c.l.s4 1966171168
        %v862 = vunpack.c.0.s8 %v861
        %v863 = vlaneseq
        %v864 = vshrl.u32 %v863, 7
        %v865 = vsub.s32 %v862, %v864
        %v866 = vrot.slane %v838, %v865
        %v867 = vcombine.low %v845, %v859
        %v868 = vcombine.low %v852, %v866
        %v871 = vadd.f32 %v867, %v868
        %872 = vadd.xlane.f32.xlu0 %v871
        %v873 = vpop.xlane.xlu0 %872
        %v874 = vmul.f32 %v873, 0.00390625
        %v875 = vmul.f32 %v874, %v395
        %v876 = vadd.f32 %v875, 0.0
        %s877 = scalar_lea.vmem %s280, 5
        %v878 = vld [vmem:[%s877] ss:$8 sm:$0x3]
        %s879 = scalar_lea.vmem %s280, 37
        %v880 = vld [vmem:[%s879] ss:$8 sm:$0x3]
        %s881 = scalar_lea.vmem %s280, 69
        %v882 = vld [vmem:[%s881] ss:$8 sm:$0x3]
        %s883 = scalar_lea.vmem %s280, 101
        %v884 = vld [vmem:[%s883] ss:$8 sm:$0x3]
        %s885 = scalar_lea.vmem %s280, 133
        %v886 = vld [vmem:[%s885] ss:$8 sm:$0x3]
        %s887 = scalar_lea.vmem %s280, 165
        %v888 = vld [vmem:[%s887] ss:$8 sm:$0x3]
        %s889 = scalar_lea.vmem %s280, 197
        %v890 = vld [vmem:[%s889] ss:$8 sm:$0x3]
        %s891 = scalar_lea.vmem %s280, 229
        %v892 = vld [vmem:[%s891] ss:$8 sm:$0x3]
        %v901 = vcombine.low %v878, %v880
        %v902 = vcombine.low %v882, %v884
        %v903 = vcombine.low %v886, %v888
        %v904 = vcombine.low %v890, %v892
        %v906 = vunpack.c.l.s4 1966171168
        %v907 = vunpack.c.0.s8 %v906
        %v908 = vlaneseq
        %v909 = vshrl.u32 %v908, 7
        %v910 = vsub.s32 %v907, %v909
        %v911 = vrot.slane %v901, %v910
        %v913 = vunpack.c.l.s4 1966171168
        %v914 = vunpack.c.0.s8 %v913
        %v915 = vlaneseq
        %v916 = vshrl.u32 %v915, 7
        %v917 = vsub.s32 %v914, %v916
        %v918 = vrot.slane %v902, %v917
        %v920 = vunpack.c.l.s4 1966171168
        %v921 = vunpack.c.0.s8 %v920
        %v922 = vlaneseq
        %v923 = vshrl.u32 %v922, 7
        %v924 = vsub.s32 %v921, %v923
        %v925 = vrot.slane %v903, %v924
        %v927 = vunpack.c.l.s4 1966171168
        %v928 = vunpack.c.0.s8 %v927
        %v929 = vlaneseq
        %v930 = vshrl.u32 %v929, 7
        %v931 = vsub.s32 %v928, %v930
        %v932 = vrot.slane %v904, %v931
        %v933 = vcombine.low %v911, %v918
        %v934 = vcombine.high %v911, %v918
        %v935 = vcombine.low %v925, %v932
        %v936 = vcombine.high %v925, %v932
        %v938 = vunpack.c.l.s4 1966171168
        %v939 = vunpack.c.0.s8 %v938
        %v940 = vlaneseq
        %v941 = vshrl.u32 %v940, 7
        %v942 = vsub.s32 %v939, %v941
        %v943 = vrot.slane %v933, %v942
        %v945 = vunpack.c.l.s4 1966171168
        %v946 = vunpack.c.0.s8 %v945
        %v947 = vlaneseq
        %v948 = vshrl.u32 %v947, 7
        %v949 = vsub.s32 %v946, %v948
        %v950 = vrot.slane %v934, %v949
        %v952 = vunpack.c.l.s4 1966171168
        %v953 = vunpack.c.0.s8 %v952
        %v954 = vlaneseq
        %v955 = vshrl.u32 %v954, 7
        %v956 = vsub.s32 %v953, %v955
        %v957 = vrot.slane %v935, %v956
        %v959 = vunpack.c.l.s4 1966171168
        %v960 = vunpack.c.0.s8 %v959
        %v961 = vlaneseq
        %v962 = vshrl.u32 %v961, 7
        %v963 = vsub.s32 %v960, %v962
        %v964 = vrot.slane %v936, %v963
        %v965 = vcombine.low %v943, %v957
        %v966 = vcombine.low %v950, %v964
        %v969 = vadd.f32 %v965, %v966
        %970 = vadd.xlane.f32.xlu0 %v969
        %v971 = vpop.xlane.xlu0 %970
        %v972 = vmul.f32 %v971, 0.00390625
        %v973 = vmul.f32 %v972, %v497
        %v974 = vadd.f32 %v876, %v973
        %s975 = scalar_lea.vmem %s280, 6
        %v976 = vld [vmem:[%s975] ss:$8 sm:$0x3]
        %s977 = scalar_lea.vmem %s280, 38
        %v978 = vld [vmem:[%s977] ss:$8 sm:$0x3]
        %s979 = scalar_lea.vmem %s280, 70
        %v980 = vld [vmem:[%s979] ss:$8 sm:$0x3]
        %s981 = scalar_lea.vmem %s280, 102
        %v982 = vld [vmem:[%s981] ss:$8 sm:$0x3]
        %s983 = scalar_lea.vmem %s280, 134
        %v984 = vld [vmem:[%s983] ss:$8 sm:$0x3]
        %s985 = scalar_lea.vmem %s280, 166
        %v986 = vld [vmem:[%s985] ss:$8 sm:$0x3]
        %s987 = scalar_lea.vmem %s280, 198
        %v988 = vld [vmem:[%s987] ss:$8 sm:$0x3]
        %s989 = scalar_lea.vmem %s280, 230
        %v990 = vld [vmem:[%s989] ss:$8 sm:$0x3]
        %v999 = vcombine.low %v976, %v978
        %v1000 = vcombine.low %v980, %v982
        %v1001 = vcombine.low %v984, %v986
        %v1002 = vcombine.low %v988, %v990
        %v1004 = vunpack.c.l.s4 1966171168
        %v1005 = vunpack.c.0.s8 %v1004
        %v1006 = vlaneseq
        %v1007 = vshrl.u32 %v1006, 7
        %v1008 = vsub.s32 %v1005, %v1007
        %v1009 = vrot.slane %v999, %v1008
        %v1011 = vunpack.c.l.s4 1966171168
        %v1012 = vunpack.c.0.s8 %v1011
        %v1013 = vlaneseq
        %v1014 = vshrl.u32 %v1013, 7
        %v1015 = vsub.s32 %v1012, %v1014
        %v1016 = vrot.slane %v1000, %v1015
        %v1018 = vunpack.c.l.s4 1966171168
        %v1019 = vunpack.c.0.s8 %v1018
        %v1020 = vlaneseq
        %v1021 = vshrl.u32 %v1020, 7
        %v1022 = vsub.s32 %v1019, %v1021
        %v1023 = vrot.slane %v1001, %v1022
        %v1025 = vunpack.c.l.s4 1966171168
        %v1026 = vunpack.c.0.s8 %v1025
        %v1027 = vlaneseq
        %v1028 = vshrl.u32 %v1027, 7
        %v1029 = vsub.s32 %v1026, %v1028
        %v1030 = vrot.slane %v1002, %v1029
        %v1031 = vcombine.low %v1009, %v1016
        %v1032 = vcombine.high %v1009, %v1016
        %v1033 = vcombine.low %v1023, %v1030
        %v1034 = vcombine.high %v1023, %v1030
        %v1036 = vunpack.c.l.s4 1966171168
        %v1037 = vunpack.c.0.s8 %v1036
        %v1038 = vlaneseq
        %v1039 = vshrl.u32 %v1038, 7
        %v1040 = vsub.s32 %v1037, %v1039
        %v1041 = vrot.slane %v1031, %v1040
        %v1043 = vunpack.c.l.s4 1966171168
        %v1044 = vunpack.c.0.s8 %v1043
        %v1045 = vlaneseq
        %v1046 = vshrl.u32 %v1045, 7
        %v1047 = vsub.s32 %v1044, %v1046
        %v1048 = vrot.slane %v1032, %v1047
        %v1050 = vunpack.c.l.s4 1966171168
        %v1051 = vunpack.c.0.s8 %v1050
        %v1052 = vlaneseq
        %v1053 = vshrl.u32 %v1052, 7
        %v1054 = vsub.s32 %v1051, %v1053
        %v1055 = vrot.slane %v1033, %v1054
        %v1057 = vunpack.c.l.s4 1966171168
        %v1058 = vunpack.c.0.s8 %v1057
        %v1059 = vlaneseq
        %v1060 = vshrl.u32 %v1059, 7
        %v1061 = vsub.s32 %v1058, %v1060
        %v1062 = vrot.slane %v1034, %v1061
        %v1063 = vcombine.low %v1041, %v1055
        %v1064 = vcombine.low %v1048, %v1062
        %v1067 = vadd.f32 %v1063, %v1064
        %1068 = vadd.xlane.f32.xlu0 %v1067
        %v1069 = vpop.xlane.xlu0 %1068
        %v1070 = vmul.f32 %v1069, 0.00390625
        %v1071 = vmul.f32 %v1070, %v599
        %v1072 = vadd.f32 %v974, %v1071
        %s1073 = scalar_lea.vmem %s280, 7
        %v1074 = vld [vmem:[%s1073] ss:$8 sm:$0x3]
        %s1075 = scalar_lea.vmem %s280, 39
        %v1076 = vld [vmem:[%s1075] ss:$8 sm:$0x3]
        %s1077 = scalar_lea.vmem %s280, 71
        %v1078 = vld [vmem:[%s1077] ss:$8 sm:$0x3]
        %s1079 = scalar_lea.vmem %s280, 103
        %v1080 = vld [vmem:[%s1079] ss:$8 sm:$0x3]
        %s1081 = scalar_lea.vmem %s280, 135
        %v1082 = vld [vmem:[%s1081] ss:$8 sm:$0x3]
        %s1083 = scalar_lea.vmem %s280, 167
        %v1084 = vld [vmem:[%s1083] ss:$8 sm:$0x3]
        %s1085 = scalar_lea.vmem %s280, 199
        %v1086 = vld [vmem:[%s1085] ss:$8 sm:$0x3]
        %s1087 = scalar_lea.vmem %s280, 231
        %v1088 = vld [vmem:[%s1087] ss:$8 sm:$0x3]
        %v1097 = vcombine.low %v1074, %v1076
        %v1098 = vcombine.low %v1078, %v1080
        %v1099 = vcombine.low %v1082, %v1084
        %v1100 = vcombine.low %v1086, %v1088
        %v1102 = vunpack.c.l.s4 1966171168
        %v1103 = vunpack.c.0.s8 %v1102
        %v1104 = vlaneseq
        %v1105 = vshrl.u32 %v1104, 7
        %v1106 = vsub.s32 %v1103, %v1105
        %v1107 = vrot.slane %v1097, %v1106
        %v1109 = vunpack.c.l.s4 1966171168
        %v1110 = vunpack.c.0.s8 %v1109
        %v1111 = vlaneseq
        %v1112 = vshrl.u32 %v1111, 7
        %v1113 = vsub.s32 %v1110, %v1112
        %v1114 = vrot.slane %v1098, %v1113
        %v1116 = vunpack.c.l.s4 1966171168
        %v1117 = vunpack.c.0.s8 %v1116
        %v1118 = vlaneseq
        %v1119 = vshrl.u32 %v1118, 7
        %v1120 = vsub.s32 %v1117, %v1119
        %v1121 = vrot.slane %v1099, %v1120
        %v1123 = vunpack.c.l.s4 1966171168
        %v1124 = vunpack.c.0.s8 %v1123
        %v1125 = vlaneseq
        %v1126 = vshrl.u32 %v1125, 7
        %v1127 = vsub.s32 %v1124, %v1126
        %v1128 = vrot.slane %v1100, %v1127
        %v1129 = vcombine.low %v1107, %v1114
        %v1130 = vcombine.high %v1107, %v1114
        %v1131 = vcombine.low %v1121, %v1128
        %v1132 = vcombine.high %v1121, %v1128
        %v1134 = vunpack.c.l.s4 1966171168
        %v1135 = vunpack.c.0.s8 %v1134
        %v1136 = vlaneseq
        %v1137 = vshrl.u32 %v1136, 7
        %v1138 = vsub.s32 %v1135, %v1137
        %v1139 = vrot.slane %v1129, %v1138
        %v1141 = vunpack.c.l.s4 1966171168
        %v1142 = vunpack.c.0.s8 %v1141
        %v1143 = vlaneseq
        %v1144 = vshrl.u32 %v1143, 7
        %v1145 = vsub.s32 %v1142, %v1144
        %v1146 = vrot.slane %v1130, %v1145
        %v1148 = vunpack.c.l.s4 1966171168
        %v1149 = vunpack.c.0.s8 %v1148
        %v1150 = vlaneseq
        %v1151 = vshrl.u32 %v1150, 7
        %v1152 = vsub.s32 %v1149, %v1151
        %v1153 = vrot.slane %v1131, %v1152
        %v1155 = vunpack.c.l.s4 1966171168
        %v1156 = vunpack.c.0.s8 %v1155
        %v1157 = vlaneseq
        %v1158 = vshrl.u32 %v1157, 7
        %v1159 = vsub.s32 %v1156, %v1158
        %v1160 = vrot.slane %v1132, %v1159
        %v1161 = vcombine.low %v1139, %v1153
        %v1162 = vcombine.low %v1146, %v1160
        %v1165 = vadd.f32 %v1161, %v1162
        %1166 = vadd.xlane.f32.xlu0 %v1165
        %v1167 = vpop.xlane.xlu0 %1166
        %v1168 = vmul.f32 %v1167, 0.00390625
        %v1169 = vmul.f32 %v1168, %v701
        %v1170 = vadd.f32 %v1072, %v1169
        %v1171 = vpack.c.bf16 %v1170, %v1170
        %v1173 = vsel %vm735, %v1171, 0
        %1175 = vmatprep.subr.bf16.mxu0 0
        %1176 = vmatpush1.bf16.msra.mxu0 %v727
        %1177 = vmatprep.subr.bf16.mxu0 0
        %1178 = vmatpush1.bf16.msra.mxu0 %v728
        %1179 = vmatprep.subr.bf16.mxu0 0
        %1180 = vmatpush1.bf16.msra.mxu0 %v729
        %1181 = vmatprep.subr.bf16.mxu0 0
        %1182 = vmatpush1.bf16.msra.mxu0 %v730
        %1183 = vmatprep.subr.bf16.mxu0 0
        %1184 = vmatpush1.bf16.msra.mxu0 0
        %1185 = vmatprep.subr.bf16.mxu0 0
        %1186 = vmatpush1.bf16.msra.mxu0 0
        %1187 = vmatprep.subr.bf16.mxu0 0
        %1188 = vmatpush1.bf16.msra.mxu0 0
        %1189 = vmatprep.subr.bf16.mxu0 0
        %1190 = vmatpush1.bf16.msra.mxu0 0
        %1191 = vmatprep.subr.bf16.mxu0 0
        %1192 = vmatpush1.bf16.msra.mxu0 0
        %1193 = vmatprep.subr.bf16.mxu0 0
        %1194 = vmatpush1.bf16.msra.mxu0 0
        %1195 = vmatprep.subr.bf16.mxu0 0
        %1196 = vmatpush1.bf16.msra.mxu0 0
        %1197 = vmatprep.subr.bf16.mxu0 0
        %1198 = vmatpush1.bf16.msra.mxu0 0
        %1199 = vmatprep.subr.bf16.mxu0 0
        %1200 = vmatpush1.bf16.msra.mxu0 0
        %1201 = vmatprep.subr.bf16.mxu0 0
        %1202 = vmatpush1.bf16.msra.mxu0 0
        %1203 = vmatprep.subr.bf16.mxu0 0
        %1204 = vmatpush1.bf16.msra.mxu0 0
        %1205 = vmatprep.subr.bf16.mxu0 0
        %1206 = vmatpush1.bf16.msra.mxu0 0
        %1207 = vmatprep.mubr.bf16.mxu0 0
        %1208 = vmatmul.mubr.bf16.gmra.mrb[0].mxu0 %v1173
        %v1209 = vpop.f32.mrb[0].mxu0
        %v1210 = vadd.f32 %v709, %v1209
        %v1211 = vpop.f32.mrb[0].mxu0
        %v1212 = vpop.f32.mrb[0].mxu0
        %v1213 = vpop.f32.mrb[0].mxu0
        %1214 = vdwg.mxu0
        %s1215 = scalar_lea.vmem %s280, 16
        %v1216 = vld [vmem:[%s1215] ss:$8 sm:$0x3]
        %s1217 = scalar_lea.vmem %s280, 48
        %v1218 = vld [vmem:[%s1217] ss:$8 sm:$0x3]
        %s1219 = scalar_lea.vmem %s280, 80
        %v1220 = vld [vmem:[%s1219] ss:$8 sm:$0x3]
        %s1221 = scalar_lea.vmem %s280, 112
        %v1222 = vld [vmem:[%s1221] ss:$8 sm:$0x3]
        %s1223 = scalar_lea.vmem %s280, 144
        %v1224 = vld [vmem:[%s1223] ss:$8 sm:$0x3]
        %s1225 = scalar_lea.vmem %s280, 176
        %v1226 = vld [vmem:[%s1225] ss:$8 sm:$0x3]
        %s1227 = scalar_lea.vmem %s280, 208
        %v1228 = vld [vmem:[%s1227] ss:$8 sm:$0x3]
        %s1229 = scalar_lea.vmem %s280, 240
        %v1230 = vld [vmem:[%s1229] ss:$8 sm:$0x3]
        %v1239 = vcombine.low %v1216, %v1218
        %v1240 = vcombine.low %v1220, %v1222
        %v1241 = vcombine.low %v1224, %v1226
        %v1242 = vcombine.low %v1228, %v1230
        %v1244 = vunpack.c.l.s4 1966171168
        %v1245 = vunpack.c.0.s8 %v1244
        %v1246 = vlaneseq
        %v1247 = vshrl.u32 %v1246, 7
        %v1248 = vsub.s32 %v1245, %v1247
        %v1249 = vrot.slane %v1239, %v1248
        %v1251 = vunpack.c.l.s4 1966171168
        %v1252 = vunpack.c.0.s8 %v1251
        %v1253 = vlaneseq
        %v1254 = vshrl.u32 %v1253, 7
        %v1255 = vsub.s32 %v1252, %v1254
        %v1256 = vrot.slane %v1240, %v1255
        %v1258 = vunpack.c.l.s4 1966171168
        %v1259 = vunpack.c.0.s8 %v1258
        %v1260 = vlaneseq
        %v1261 = vshrl.u32 %v1260, 7
        %v1262 = vsub.s32 %v1259, %v1261
        %v1263 = vrot.slane %v1241, %v1262
        %v1265 = vunpack.c.l.s4 1966171168
        %v1266 = vunpack.c.0.s8 %v1265
        %v1267 = vlaneseq
        %v1268 = vshrl.u32 %v1267, 7
        %v1269 = vsub.s32 %v1266, %v1268
        %v1270 = vrot.slane %v1242, %v1269
        %v1271 = vcombine.low %v1249, %v1256
        %v1272 = vcombine.high %v1249, %v1256
        %v1273 = vcombine.low %v1263, %v1270
        %v1274 = vcombine.high %v1263, %v1270
        %v1276 = vunpack.c.l.s4 1966171168
        %v1277 = vunpack.c.0.s8 %v1276
        %v1278 = vlaneseq
        %v1279 = vshrl.u32 %v1278, 7
        %v1280 = vsub.s32 %v1277, %v1279
        %v1281 = vrot.slane %v1271, %v1280
        %v1283 = vunpack.c.l.s4 1966171168
        %v1284 = vunpack.c.0.s8 %v1283
        %v1285 = vlaneseq
        %v1286 = vshrl.u32 %v1285, 7
        %v1287 = vsub.s32 %v1284, %v1286
        %v1288 = vrot.slane %v1272, %v1287
        %v1290 = vunpack.c.l.s4 1966171168
        %v1291 = vunpack.c.0.s8 %v1290
        %v1292 = vlaneseq
        %v1293 = vshrl.u32 %v1292, 7
        %v1294 = vsub.s32 %v1291, %v1293
        %v1295 = vrot.slane %v1273, %v1294
        %v1297 = vunpack.c.l.s4 1966171168
        %v1298 = vunpack.c.0.s8 %v1297
        %v1299 = vlaneseq
        %v1300 = vshrl.u32 %v1299, 7
        %v1301 = vsub.s32 %v1298, %v1300
        %v1302 = vrot.slane %v1274, %v1301
        %v1303 = vcombine.low %v1281, %v1295
        %v1304 = vcombine.low %v1288, %v1302
        %v1307 = vadd.f32 %v1303, %v1304
        %1308 = vadd.xlane.f32.xlu0 %v1307
        %v1309 = vpop.xlane.xlu0 %1308
        %v1310 = vmul.f32 %v1309, 0.00390625
        %v1311 = vmul.f32 %v1310, %v395
        %v1312 = vadd.f32 %v1311, 0.0
        %s1313 = scalar_lea.vmem %s280, 17
        %v1314 = vld [vmem:[%s1313] ss:$8 sm:$0x3]
        %s1315 = scalar_lea.vmem %s280, 49
        %v1316 = vld [vmem:[%s1315] ss:$8 sm:$0x3]
        %s1317 = scalar_lea.vmem %s280, 81
        %v1318 = vld [vmem:[%s1317] ss:$8 sm:$0x3]
        %s1319 = scalar_lea.vmem %s280, 113
        %v1320 = vld [vmem:[%s1319] ss:$8 sm:$0x3]
        %s1321 = scalar_lea.vmem %s280, 145
        %v1322 = vld [vmem:[%s1321] ss:$8 sm:$0x3]
        %s1323 = scalar_lea.vmem %s280, 177
        %v1324 = vld [vmem:[%s1323] ss:$8 sm:$0x3]
        %s1325 = scalar_lea.vmem %s280, 209
        %v1326 = vld [vmem:[%s1325] ss:$8 sm:$0x3]
        %s1327 = scalar_lea.vmem %s280, 241
        %v1328 = vld [vmem:[%s1327] ss:$8 sm:$0x3]
        %v1337 = vcombine.low %v1314, %v1316
        %v1338 = vcombine.low %v1318, %v1320
        %v1339 = vcombine.low %v1322, %v1324
        %v1340 = vcombine.low %v1326, %v1328
        %v1342 = vunpack.c.l.s4 1966171168
        %v1343 = vunpack.c.0.s8 %v1342
        %v1344 = vlaneseq
        %v1345 = vshrl.u32 %v1344, 7
        %v1346 = vsub.s32 %v1343, %v1345
        %v1347 = vrot.slane %v1337, %v1346
        %v1349 = vunpack.c.l.s4 1966171168
        %v1350 = vunpack.c.0.s8 %v1349
        %v1351 = vlaneseq
        %v1352 = vshrl.u32 %v1351, 7
        %v1353 = vsub.s32 %v1350, %v1352
        %v1354 = vrot.slane %v1338, %v1353
        %v1356 = vunpack.c.l.s4 1966171168
        %v1357 = vunpack.c.0.s8 %v1356
        %v1358 = vlaneseq
        %v1359 = vshrl.u32 %v1358, 7
        %v1360 = vsub.s32 %v1357, %v1359
        %v1361 = vrot.slane %v1339, %v1360
        %v1363 = vunpack.c.l.s4 1966171168
        %v1364 = vunpack.c.0.s8 %v1363
        %v1365 = vlaneseq
        %v1366 = vshrl.u32 %v1365, 7
        %v1367 = vsub.s32 %v1364, %v1366
        %v1368 = vrot.slane %v1340, %v1367
        %v1369 = vcombine.low %v1347, %v1354
        %v1370 = vcombine.high %v1347, %v1354
        %v1371 = vcombine.low %v1361, %v1368
        %v1372 = vcombine.high %v1361, %v1368
        %v1374 = vunpack.c.l.s4 1966171168
        %v1375 = vunpack.c.0.s8 %v1374
        %v1376 = vlaneseq
        %v1377 = vshrl.u32 %v1376, 7
        %v1378 = vsub.s32 %v1375, %v1377
        %v1379 = vrot.slane %v1369, %v1378
        %v1381 = vunpack.c.l.s4 1966171168
        %v1382 = vunpack.c.0.s8 %v1381
        %v1383 = vlaneseq
        %v1384 = vshrl.u32 %v1383, 7
        %v1385 = vsub.s32 %v1382, %v1384
        %v1386 = vrot.slane %v1370, %v1385
        %v1388 = vunpack.c.l.s4 1966171168
        %v1389 = vunpack.c.0.s8 %v1388
        %v1390 = vlaneseq
        %v1391 = vshrl.u32 %v1390, 7
        %v1392 = vsub.s32 %v1389, %v1391
        %v1393 = vrot.slane %v1371, %v1392
        %v1395 = vunpack.c.l.s4 1966171168
        %v1396 = vunpack.c.0.s8 %v1395
        %v1397 = vlaneseq
        %v1398 = vshrl.u32 %v1397, 7
        %v1399 = vsub.s32 %v1396, %v1398
        %v1400 = vrot.slane %v1372, %v1399
        %v1401 = vcombine.low %v1379, %v1393
        %v1402 = vcombine.low %v1386, %v1400
        %v1405 = vadd.f32 %v1401, %v1402
        %1406 = vadd.xlane.f32.xlu0 %v1405
        %v1407 = vpop.xlane.xlu0 %1406
        %v1408 = vmul.f32 %v1407, 0.00390625
        %v1409 = vmul.f32 %v1408, %v497
        %v1410 = vadd.f32 %v1312, %v1409
        %s1411 = scalar_lea.vmem %s280, 18
        %v1412 = vld [vmem:[%s1411] ss:$8 sm:$0x3]
        %s1413 = scalar_lea.vmem %s280, 50
        %v1414 = vld [vmem:[%s1413] ss:$8 sm:$0x3]
        %s1415 = scalar_lea.vmem %s280, 82
        %v1416 = vld [vmem:[%s1415] ss:$8 sm:$0x3]
        %s1417 = scalar_lea.vmem %s280, 114
        %v1418 = vld [vmem:[%s1417] ss:$8 sm:$0x3]
        %s1419 = scalar_lea.vmem %s280, 146
        %v1420 = vld [vmem:[%s1419] ss:$8 sm:$0x3]
        %s1421 = scalar_lea.vmem %s280, 178
        %v1422 = vld [vmem:[%s1421] ss:$8 sm:$0x3]
        %s1423 = scalar_lea.vmem %s280, 210
        %v1424 = vld [vmem:[%s1423] ss:$8 sm:$0x3]
        %s1425 = scalar_lea.vmem %s280, 242
        %v1426 = vld [vmem:[%s1425] ss:$8 sm:$0x3]
        %v1435 = vcombine.low %v1412, %v1414
        %v1436 = vcombine.low %v1416, %v1418
        %v1437 = vcombine.low %v1420, %v1422
        %v1438 = vcombine.low %v1424, %v1426
        %v1440 = vunpack.c.l.s4 1966171168
        %v1441 = vunpack.c.0.s8 %v1440
        %v1442 = vlaneseq
        %v1443 = vshrl.u32 %v1442, 7
        %v1444 = vsub.s32 %v1441, %v1443
        %v1445 = vrot.slane %v1435, %v1444
        %v1447 = vunpack.c.l.s4 1966171168
        %v1448 = vunpack.c.0.s8 %v1447
        %v1449 = vlaneseq
        %v1450 = vshrl.u32 %v1449, 7
        %v1451 = vsub.s32 %v1448, %v1450
        %v1452 = vrot.slane %v1436, %v1451
        %v1454 = vunpack.c.l.s4 1966171168
        %v1455 = vunpack.c.0.s8 %v1454
        %v1456 = vlaneseq
        %v1457 = vshrl.u32 %v1456, 7
        %v1458 = vsub.s32 %v1455, %v1457
        %v1459 = vrot.slane %v1437, %v1458
        %v1461 = vunpack.c.l.s4 1966171168
        %v1462 = vunpack.c.0.s8 %v1461
        %v1463 = vlaneseq
        %v1464 = vshrl.u32 %v1463, 7
        %v1465 = vsub.s32 %v1462, %v1464
        %v1466 = vrot.slane %v1438, %v1465
        %v1467 = vcombine.low %v1445, %v1452
        %v1468 = vcombine.high %v1445, %v1452
        %v1469 = vcombine.low %v1459, %v1466
        %v1470 = vcombine.high %v1459, %v1466
        %v1472 = vunpack.c.l.s4 1966171168
        %v1473 = vunpack.c.0.s8 %v1472
        %v1474 = vlaneseq
        %v1475 = vshrl.u32 %v1474, 7
        %v1476 = vsub.s32 %v1473, %v1475
        %v1477 = vrot.slane %v1467, %v1476
        %v1479 = vunpack.c.l.s4 1966171168
        %v1480 = vunpack.c.0.s8 %v1479
        %v1481 = vlaneseq
        %v1482 = vshrl.u32 %v1481, 7
        %v1483 = vsub.s32 %v1480, %v1482
        %v1484 = vrot.slane %v1468, %v1483
        %v1486 = vunpack.c.l.s4 1966171168
        %v1487 = vunpack.c.0.s8 %v1486
        %v1488 = vlaneseq
        %v1489 = vshrl.u32 %v1488, 7
        %v1490 = vsub.s32 %v1487, %v1489
        %v1491 = vrot.slane %v1469, %v1490
        %v1493 = vunpack.c.l.s4 1966171168
        %v1494 = vunpack.c.0.s8 %v1493
        %v1495 = vlaneseq
        %v1496 = vshrl.u32 %v1495, 7
        %v1497 = vsub.s32 %v1494, %v1496
        %v1498 = vrot.slane %v1470, %v1497
        %v1499 = vcombine.low %v1477, %v1491
        %v1500 = vcombine.low %v1484, %v1498
        %v1503 = vadd.f32 %v1499, %v1500
        %1504 = vadd.xlane.f32.xlu0 %v1503
        %v1505 = vpop.xlane.xlu0 %1504
        %v1506 = vmul.f32 %v1505, 0.00390625
        %v1507 = vmul.f32 %v1506, %v599
        %v1508 = vadd.f32 %v1410, %v1507
        %s1509 = scalar_lea.vmem %s280, 19
        %v1510 = vld [vmem:[%s1509] ss:$8 sm:$0x3]
        %s1511 = scalar_lea.vmem %s280, 51
        %v1512 = vld [vmem:[%s1511] ss:$8 sm:$0x3]
        %s1513 = scalar_lea.vmem %s280, 83
        %v1514 = vld [vmem:[%s1513] ss:$8 sm:$0x3]
        %s1515 = scalar_lea.vmem %s280, 115
        %v1516 = vld [vmem:[%s1515] ss:$8 sm:$0x3]
        %s1517 = scalar_lea.vmem %s280, 147
        %v1518 = vld [vmem:[%s1517] ss:$8 sm:$0x3]
        %s1519 = scalar_lea.vmem %s280, 179
        %v1520 = vld [vmem:[%s1519] ss:$8 sm:$0x3]
        %s1521 = scalar_lea.vmem %s280, 211
        %v1522 = vld [vmem:[%s1521] ss:$8 sm:$0x3]
        %s1523 = scalar_lea.vmem %s280, 243
        %v1524 = vld [vmem:[%s1523] ss:$8 sm:$0x3]
        %v1533 = vcombine.low %v1510, %v1512
        %v1534 = vcombine.low %v1514, %v1516
        %v1535 = vcombine.low %v1518, %v1520
        %v1536 = vcombine.low %v1522, %v1524
        %v1538 = vunpack.c.l.s4 1966171168
        %v1539 = vunpack.c.0.s8 %v1538
        %v1540 = vlaneseq
        %v1541 = vshrl.u32 %v1540, 7
        %v1542 = vsub.s32 %v1539, %v1541
        %v1543 = vrot.slane %v1533, %v1542
        %v1545 = vunpack.c.l.s4 1966171168
        %v1546 = vunpack.c.0.s8 %v1545
        %v1547 = vlaneseq
        %v1548 = vshrl.u32 %v1547, 7
        %v1549 = vsub.s32 %v1546, %v1548
        %v1550 = vrot.slane %v1534, %v1549
        %v1552 = vunpack.c.l.s4 1966171168
        %v1553 = vunpack.c.0.s8 %v1552
        %v1554 = vlaneseq
        %v1555 = vshrl.u32 %v1554, 7
        %v1556 = vsub.s32 %v1553, %v1555
        %v1557 = vrot.slane %v1535, %v1556
        %v1559 = vunpack.c.l.s4 1966171168
        %v1560 = vunpack.c.0.s8 %v1559
        %v1561 = vlaneseq
        %v1562 = vshrl.u32 %v1561, 7
        %v1563 = vsub.s32 %v1560, %v1562
        %v1564 = vrot.slane %v1536, %v1563
        %v1565 = vcombine.low %v1543, %v1550
        %v1566 = vcombine.high %v1543, %v1550
        %v1567 = vcombine.low %v1557, %v1564
        %v1568 = vcombine.high %v1557, %v1564
        %v1570 = vunpack.c.l.s4 1966171168
        %v1571 = vunpack.c.0.s8 %v1570
        %v1572 = vlaneseq
        %v1573 = vshrl.u32 %v1572, 7
        %v1574 = vsub.s32 %v1571, %v1573
        %v1575 = vrot.slane %v1565, %v1574
        %v1577 = vunpack.c.l.s4 1966171168
        %v1578 = vunpack.c.0.s8 %v1577
        %v1579 = vlaneseq
        %v1580 = vshrl.u32 %v1579, 7
        %v1581 = vsub.s32 %v1578, %v1580
        %v1582 = vrot.slane %v1566, %v1581
        %v1584 = vunpack.c.l.s4 1966171168
        %v1585 = vunpack.c.0.s8 %v1584
        %v1586 = vlaneseq
        %v1587 = vshrl.u32 %v1586, 7
        %v1588 = vsub.s32 %v1585, %v1587
        %v1589 = vrot.slane %v1567, %v1588
        %v1591 = vunpack.c.l.s4 1966171168
        %v1592 = vunpack.c.0.s8 %v1591
        %v1593 = vlaneseq
        %v1594 = vshrl.u32 %v1593, 7
        %v1595 = vsub.s32 %v1592, %v1594
        %v1596 = vrot.slane %v1568, %v1595
        %v1597 = vcombine.low %v1575, %v1589
        %v1598 = vcombine.low %v1582, %v1596
        %v1601 = vadd.f32 %v1597, %v1598
        %1602 = vadd.xlane.f32.xlu0 %v1601
        %v1603 = vpop.xlane.xlu0 %1602
        %v1604 = vmul.f32 %v1603, 0.00390625
        %v1605 = vmul.f32 %v1604, %v701
        %v1606 = vadd.f32 %v1508, %v1605
        %v1607 = vpack.c.bf16 %v1606, %v1606
        %v1609 = vsel %vm735, %v1607, 0
        %1611 = vmatprep.subr.bf16.mxu0 0
        %1612 = vmatpush1.bf16.msra.mxu0 %v727
        %1613 = vmatprep.subr.bf16.mxu0 0
        %1614 = vmatpush1.bf16.msra.mxu0 %v728
        %1615 = vmatprep.subr.bf16.mxu0 0
        %1616 = vmatpush1.bf16.msra.mxu0 %v729
        %1617 = vmatprep.subr.bf16.mxu0 0
        %1618 = vmatpush1.bf16.msra.mxu0 %v730
        %1619 = vmatprep.subr.bf16.mxu0 0
        %1620 = vmatpush1.bf16.msra.mxu0 0
        %1621 = vmatprep.subr.bf16.mxu0 0
        %1622 = vmatpush1.bf16.msra.mxu0 0
        %1623 = vmatprep.subr.bf16.mxu0 0
        %1624 = vmatpush1.bf16.msra.mxu0 0
        %1625 = vmatprep.subr.bf16.mxu0 0
        %1626 = vmatpush1.bf16.msra.mxu0 0
        %1627 = vmatprep.subr.bf16.mxu0 0
        %1628 = vmatpush1.bf16.msra.mxu0 0
        %1629 = vmatprep.subr.bf16.mxu0 0
        %1630 = vmatpush1.bf16.msra.mxu0 0
        %1631 = vmatprep.subr.bf16.mxu0 0
        %1632 = vmatpush1.bf16.msra.mxu0 0
        %1633 = vmatprep.subr.bf16.mxu0 0
        %1634 = vmatpush1.bf16.msra.mxu0 0
        %1635 = vmatprep.subr.bf16.mxu0 0
        %1636 = vmatpush1.bf16.msra.mxu0 0
        %1637 = vmatprep.subr.bf16.mxu0 0
        %1638 = vmatpush1.bf16.msra.mxu0 0
        %1639 = vmatprep.subr.bf16.mxu0 0
        %1640 = vmatpush1.bf16.msra.mxu0 0
        %1641 = vmatprep.subr.bf16.mxu0 0
        %1642 = vmatpush1.bf16.msra.mxu0 0
        %1643 = vmatprep.mubr.bf16.mxu0 0
        %1644 = vmatmul.mubr.bf16.gmra.mrb[0].mxu0 %v1609
        %v1645 = vpop.f32.mrb[0].mxu0
        %v1646 = vadd.f32 %v709, %v1645
        %v1647 = vpop.f32.mrb[0].mxu0
        %v1648 = vpop.f32.mrb[0].mxu0
        %v1649 = vpop.f32.mrb[0].mxu0
        %1650 = vdwg.mxu0
        %v1655 = vunpack.c.l.b16 %v292
        %v1656 = vunpack.c.l.b16 %v293
        %v1657 = vunpack.c.l.b16 %v294
        %v1658 = vunpack.c.l.b16 %v295
        %v1659 = vpack.c.b16 %v1656, %v1655
        %v1660 = vpack.c.b16 %v1658, %v1657
        %vm1663 = vcmask 261120
        %v1665 = vsel %vm1663, 0, 0
        %1667 = vmatprep.subr.bf16.mxu0 0
        %1668 = vmatpush1.bf16.msra.mxu0 %v1659
        %1669 = vmatprep.subr.bf16.mxu0 0
        %1670 = vmatpush1.bf16.msra.mxu0 %v1660
        %1671 = vmatprep.subr.bf16.mxu0 0
        %1672 = vmatpush1.bf16.msra.mxu0 0
        %1673 = vmatprep.subr.bf16.mxu0 0
        %1674 = vmatpush1.bf16.msra.mxu0 0
        %1675 = vmatprep.subr.bf16.mxu0 0
        %1676 = vmatpush1.bf16.msra.mxu0 0
        %1677 = vmatprep.subr.bf16.mxu0 0
        %1678 = vmatpush1.bf16.msra.mxu0 0
        %1679 = vmatprep.subr.bf16.mxu0 0
        %1680 = vmatpush1.bf16.msra.mxu0 0
        %1681 = vmatprep.subr.bf16.mxu0 0
        %1682 = vmatpush1.bf16.msra.mxu0 0
        %1683 = vmatprep.subr.bf16.mxu0 0
        %1684 = vmatpush1.bf16.msra.mxu0 0
        %1685 = vmatprep.subr.bf16.mxu0 0
        %1686 = vmatpush1.bf16.msra.mxu0 0
        %1687 = vmatprep.subr.bf16.mxu0 0
        %1688 = vmatpush1.bf16.msra.mxu0 0
        %1689 = vmatprep.subr.bf16.mxu0 0
        %1690 = vmatpush1.bf16.msra.mxu0 0
        %1691 = vmatprep.subr.bf16.mxu0 0
        %1692 = vmatpush1.bf16.msra.mxu0 0
        %1693 = vmatprep.subr.bf16.mxu0 0
        %1694 = vmatpush1.bf16.msra.mxu0 0
        %1695 = vmatprep.subr.bf16.mxu0 0
        %1696 = vmatpush1.bf16.msra.mxu0 0
        %1697 = vmatprep.subr.bf16.mxu0 0
        %1698 = vmatpush1.bf16.msra.mxu0 0
        %1699 = vmatprep.mubr.bf16.mxu0 0
        %1700 = vmatmul.mubr.bf16.gmra.mrb[0].mxu0 %v1665
        %v1701 = vpop.f32.mrb[0].mxu0
        %v1702 = vadd.f32 0.0, %v1701
        %v1703 = vpop.f32.mrb[0].mxu0
        %v1704 = vpop.f32.mrb[0].mxu0
        %v1705 = vpop.f32.mrb[0].mxu0
        %1706 = vdwg.mxu0
        %v1707 = vadd.f32 %v774, %v1702
        %v1708 = vxor.u32 %v1707, 2147483648
        %v1709 = vmul.f32 %v1708, 1.442695
        %v1710 = vpow.pop %v1709
        %v1711 = vadd.f32 %v1710, 1.0
        %v1712 = vrcp.pop %v1711
        %v1713 = vmul.f32 1.0, %v1712
        %v1714 = vtanh.pop %v1707
        %v1715 = vmul.f32 %v1713, 0.0
        %1717 = vrot.lane.b32.xlu0 %v1714, 64
        %v1718 = vpop.permute.xlu0 %1717
        %v1720 = vmul.f32 %v1713, %v1718
        %1722 = vrot.lane.b32.xlu0 %v1720, 32
        %v1723 = vpop.permute.xlu0 %1722
        %v1725 = vadd.f32 %v1715, %v1723
        %v1726 = vtanh.pop %v1725
        %1728 = vrot.lane.b32.xlu0 %v1726, 64
        %v1729 = vpop.permute.xlu0 %1728
        %v1731 = vmul.f32 %v1713, %v1729
        %v1732 = vpack.c.bf16 %v1731, %v1731
        %1734 = vrot.lane.b32.xlu0 %v1732, 32
        %v1735 = vpop.permute.xlu0 %1734
        %v1737 = vsel %vm1663, %v1735, 0
        %1739 = vmatprep.subr.bf16.mxu0 0
        %1740 = vmatpush1.bf16.msra.mxu0 %v1659
        %1741 = vmatprep.subr.bf16.mxu0 0
        %1742 = vmatpush1.bf16.msra.mxu0 %v1660
        %1743 = vmatprep.subr.bf16.mxu0 0
        %1744 = vmatpush1.bf16.msra.mxu0 0
        %1745 = vmatprep.subr.bf16.mxu0 0
        %1746 = vmatpush1.bf16.msra.mxu0 0
        %1747 = vmatprep.subr.bf16.mxu0 0
        %1748 = vmatpush1.bf16.msra.mxu0 0
        %1749 = vmatprep.subr.bf16.mxu0 0
        %1750 = vmatpush1.bf16.msra.mxu0 0
        %1751 = vmatprep.subr.bf16.mxu0 0
        %1752 = vmatpush1.bf16.msra.mxu0 0
        %1753 = vmatprep.subr.bf16.mxu0 0
        %1754 = vmatpush1.bf16.msra.mxu0 0
        %1755 = vmatprep.subr.bf16.mxu0 0
        %1756 = vmatpush1.bf16.msra.mxu0 0
        %1757 = vmatprep.subr.bf16.mxu0 0
        %1758 = vmatpush1.bf16.msra.mxu0 0
        %1759 = vmatprep.subr.bf16.mxu0 0
        %1760 = vmatpush1.bf16.msra.mxu0 0
        %1761 = vmatprep.subr.bf16.mxu0 0
        %1762 = vmatpush1.bf16.msra.mxu0 0
        %1763 = vmatprep.subr.bf16.mxu0 0
        %1764 = vmatpush1.bf16.msra.mxu0 0
        %1765 = vmatprep.subr.bf16.mxu0 0
        %1766 = vmatpush1.bf16.msra.mxu0 0
        %1767 = vmatprep.subr.bf16.mxu0 0
        %1768 = vmatpush1.bf16.msra.mxu0 0
        %1769 = vmatprep.subr.bf16.mxu0 0
        %1770 = vmatpush1.bf16.msra.mxu0 0
        %1771 = vmatprep.mubr.bf16.mxu0 0
        %1772 = vmatmul.mubr.bf16.gmra.mrb[0].mxu0 %v1737
        %v1773 = vpop.f32.mrb[0].mxu0
        %v1774 = vadd.f32 0.0, %v1773
        %v1775 = vpop.f32.mrb[0].mxu0
        %v1776 = vpop.f32.mrb[0].mxu0
        %v1777 = vpop.f32.mrb[0].mxu0
        %1778 = vdwg.mxu0
        %v1779 = vadd.f32 %v1210, %v1774
        %v1780 = vxor.u32 %v1779, 2147483648
        %v1781 = vmul.f32 %v1780, 1.442695
        %v1782 = vpow.pop %v1781
        %v1783 = vadd.f32 %v1782, 1.0
        %v1784 = vrcp.pop %v1783
        %v1785 = vmul.f32 1.0, %v1784
        %v1786 = vtanh.pop %v1779
        %v1787 = vmul.f32 %v1785, %v1725
        %1789 = vrot.lane.b32.xlu0 %v1786, 64
        %v1790 = vpop.permute.xlu0 %1789
        %v1792 = vmul.f32 %v1785, %v1790
        %1794 = vrot.lane.b32.xlu0 %v1792, 32
        %v1795 = vpop.permute.xlu0 %1794
        %v1797 = vadd.f32 %v1787, %v1795
        %v1798 = vtanh.pop %v1797
        %1800 = vrot.lane.b32.xlu0 %v1798, 64
        %v1801 = vpop.permute.xlu0 %1800
        %v1803 = vmul.f32 %v1785, %v1801
        %v1804 = vpack.c.bf16 %v1803, %v1803
        %1806 = vrot.lane.b32.xlu0 %v1804, 32
        %v1807 = vpop.permute.xlu0 %1806
        %v1809 = vsel %vm1663, %v1807, 0
        %1811 = vmatprep.subr.bf16.mxu0 0
        %1812 = vmatpush1.bf16.msra.mxu0 %v1659
        %1813 = vmatprep.subr.bf16.mxu0 0
        %1814 = vmatpush1.bf16.msra.mxu0 %v1660
        %1815 = vmatprep.subr.bf16.mxu0 0
        %1816 = vmatpush1.bf16.msra.mxu0 0
        %1817 = vmatprep.subr.bf16.mxu0 0
        %1818 = vmatpush1.bf16.msra.mxu0 0
        %1819 = vmatprep.subr.bf16.mxu0 0
        %1820 = vmatpush1.bf16.msra.mxu0 0
        %1821 = vmatprep.subr.bf16.mxu0 0
        %1822 = vmatpush1.bf16.msra.mxu0 0
        %1823 = vmatprep.subr.bf16.mxu0 0
        %1824 = vmatpush1.bf16.msra.mxu0 0
        %1825 = vmatprep.subr.bf16.mxu0 0
        %1826 = vmatpush1.bf16.msra.mxu0 0
        %1827 = vmatprep.subr.bf16.mxu0 0
        %1828 = vmatpush1.bf16.msra.mxu0 0
        %1829 = vmatprep.subr.bf16.mxu0 0
        %1830 = vmatpush1.bf16.msra.mxu0 0
        %1831 = vmatprep.subr.bf16.mxu0 0
        %1832 = vmatpush1.bf16.msra.mxu0 0
        %1833 = vmatprep.subr.bf16.mxu0 0
        %1834 = vmatpush1.bf16.msra.mxu0 0
        %1835 = vmatprep.subr.bf16.mxu0 0
        %1836 = vmatpush1.bf16.msra.mxu0 0
        %1837 = vmatprep.subr.bf16.mxu0 0
        %1838 = vmatpush1.bf16.msra.mxu0 0
        %1839 = vmatprep.subr.bf16.mxu0 0
        %1840 = vmatpush1.bf16.msra.mxu0 0
        %1841 = vmatprep.subr.bf16.mxu0 0
        %1842 = vmatpush1.bf16.msra.mxu0 0
        %1843 = vmatprep.mubr.bf16.mxu0 0
        %1844 = vmatmul.mubr.bf16.gmra.mrb[0].mxu0 %v1809
        %v1845 = vpop.f32.mrb[0].mxu0
        %v1846 = vadd.f32 0.0, %v1845
        %v1847 = vpop.f32.mrb[0].mxu0
        %v1848 = vpop.f32.mrb[0].mxu0
        %v1849 = vpop.f32.mrb[0].mxu0
        %1850 = vdwg.mxu0
        %v1851 = vadd.f32 %v1646, %v1846
        %v1852 = vxor.u32 %v1851, 2147483648
        %v1853 = vmul.f32 %v1852, 1.442695
        %v1854 = vpow.pop %v1853
        %v1855 = vadd.f32 %v1854, 1.0
        %v1856 = vrcp.pop %v1855
        %v1857 = vmul.f32 1.0, %v1856
        %v1858 = vtanh.pop %v1851
        %v1859 = vmul.f32 %v1857, %v1797
        %1861 = vrot.lane.b32.xlu0 %v1858, 64
        %v1862 = vpop.permute.xlu0 %1861
        %v1864 = vmul.f32 %v1857, %v1862
        %1866 = vrot.lane.b32.xlu0 %v1864, 32
        %v1867 = vpop.permute.xlu0 %1866
        %v1869 = vadd.f32 %v1859, %v1867
        %v1870 = vtanh.pop %v1869
        %1872 = vrot.lane.b32.xlu0 %v1870, 64
        %v1873 = vpop.permute.xlu0 %1872
        %v1875 = vmul.f32 %v1857, %v1873
        %v1876 = vpack.c.bf16 %v1875, %v1875
        %v1877 = vld [vmem:[%s5] sm:$0xf]
        %v1878 = vld [vmem:[%s5 + $0x4] sm:$0xf]
        %v1879 = vld [vmem:[%s5 + $0x8] sm:$0xf]
        %v1880 = vld [vmem:[%s5 + $0xc] sm:$0xf]
        %v1881 = vld [vmem:[%s6] sm:$0x1]
        %v1883 = vlaneseq
        %v1884 = vshrl.u32 %v1883, 7
        %v1885 = vsub.s32 0, %v1884
        %v1886 = vrot.slane %v1881, %v1885
        %1889 = vrot.lane.b32.xlu0 %v1876, 32
        %v1890 = vpop.permute.xlu0 %1889
        %v1895 = vunpack.c.l.b16 %v1877
        %v1896 = vunpack.c.l.b16 %v1878
        %v1897 = vunpack.c.l.b16 %v1879
        %v1898 = vunpack.c.l.b16 %v1880
        %v1899 = vpack.c.b16 %v1896, %v1895
        %v1900 = vpack.c.b16 %v1898, %v1897
        %v1904 = vsel %vm1663, %v1890, 0
        %1906 = vmatprep.subr.bf16.mxu0 0
        %1907 = vmatpush1.bf16.msra.mxu0 %v1899
        %1908 = vmatprep.subr.bf16.mxu0 0
        %1909 = vmatpush1.bf16.msra.mxu0 %v1900
        %1910 = vmatprep.subr.bf16.mxu0 0
        %1911 = vmatpush1.bf16.msra.mxu0 0
        %1912 = vmatprep.subr.bf16.mxu0 0
        %1913 = vmatpush1.bf16.msra.mxu0 0
        %1914 = vmatprep.subr.bf16.mxu0 0
        %1915 = vmatpush1.bf16.msra.mxu0 0
        %1916 = vmatprep.subr.bf16.mxu0 0
        %1917 = vmatpush1.bf16.msra.mxu0 0
        %1918 = vmatprep.subr.bf16.mxu0 0
        %1919 = vmatpush1.bf16.msra.mxu0 0
        %1920 = vmatprep.subr.bf16.mxu0 0
        %1921 = vmatpush1.bf16.msra.mxu0 0
        %1922 = vmatprep.subr.bf16.mxu0 0
        %1923 = vmatpush1.bf16.msra.mxu0 0
        %1924 = vmatprep.subr.bf16.mxu0 0
        %1925 = vmatpush1.bf16.msra.mxu0 0
        %1926 = vmatprep.subr.bf16.mxu0 0
        %1927 = vmatpush1.bf16.msra.mxu0 0
        %1928 = vmatprep.subr.bf16.mxu0 0
        %1929 = vmatpush1.bf16.msra.mxu0 0
        %1930 = vmatprep.subr.bf16.mxu0 0
        %1931 = vmatpush1.bf16.msra.mxu0 0
        %1932 = vmatprep.subr.bf16.mxu0 0
        %1933 = vmatpush1.bf16.msra.mxu0 0
        %1934 = vmatprep.subr.bf16.mxu0 0
        %1935 = vmatpush1.bf16.msra.mxu0 0
        %1936 = vmatprep.subr.bf16.mxu0 0
        %1937 = vmatpush1.bf16.msra.mxu0 0
        %1938 = vmatprep.mubr.bf16.mxu0 0
        %1939 = vmatmul.mubr.bf16.gmra.mrb[0].mxu0 %v1904
        %v1940 = vpop.f32.mrb[0].mxu0
        %v1941 = vadd.f32 %v1886, %v1940
        %v1942 = vpop.f32.mrb[0].mxu0
        %v1943 = vpop.f32.mrb[0].mxu0
        %v1944 = vpop.f32.mrb[0].mxu0
        %1945 = vdwg.mxu0
        %1946 = vst [vmem:[%s274] sm:$0xff] %v1941
        %s1947 = sand.u32 %s181, 1
        %s1948 = scalar_lea.sflag [#allocation3], %s1947
        %s1949 = sand.u32 %s181, 1
        %s1950 = smul.addr %s1949, 8
        %s1951 = scalar_lea.vmem [#allocation2], %s1950
        // Predicated region
        $region49: #{tpu_custom_call.1} parent=47 // pred_check
          %p1952 = pneg %p191
        $region50: #{tpu_custom_call.1} parent=47 // pred_check_branch
          %1954 = sbr.rel (%p1952) target = $region52
        $region51: #{tpu_custom_call.1} parent=47 // pred_region
          %s1956 = ssub.s32 128, 128
          %1957 = vsyncadd %s1948, %s1956
          %s1958 = smul.addr %s21, 128
          %s1959 = scalar_lea.hbm %s7, %s1958
          %s1961 = sshll.u32 %s1951, 4
          %s1962 = int_to_ptr.vmem [resolvable:$true] %s1961
          %1964 = dma.vmem_to_hbm [thread:$0]  %s1962, 128, %s1959, %s1948
        $region52: #{tpu_custom_call.1} parent=47 // pred_fallthru
          _
      $region48: #{tpu_custom_call.1} parent=5 // pred_fallthru
        _
      %p1965 = scmp.le.s32.totalorder 2, %s16
      // Predicated region
      $region53: #{tpu_custom_call.1} parent=5 // pred_check
        %p1966 = pneg %p1965
      $region54: #{tpu_custom_call.1} parent=5 // pred_check_branch
        %1968 = sbr.rel (%p1966) target = $region56
      $region55: #{tpu_custom_call.1} parent=5 // pred_region
        %s1969 = ssub.s32 %s16, 2
        // Predicated region
        $region57: #{tpu_custom_call.1} parent=55 // pred_check
          %p1970 = pneg %p197
        $region58: #{tpu_custom_call.1} parent=55 // pred_check_branch
          %1972 = sbr.rel (%p1970) target = $region60
        $region59: #{tpu_custom_call.1} parent=55 // pred_region
          %s1973 = sand.u32 %s182, 1
          %s1974 = scalar_lea.sflag [#allocation3], %s1973
          %s1975 = sand.u32 %s182, 1
          %s1976 = smul.addr %s1975, 8
          %s1977 = scalar_lea.vmem [#allocation2], %s1976
          %1978 = dma.done %s1974, 128
        $region60: #{tpu_custom_call.1} parent=55 // pred_fallthru
          _
      $region56: #{tpu_custom_call.1} parent=5 // pred_fallthru
        _
    $region6: #{tpu_custom_call.1} parent=1 // loop_footer
      %s20 = sadd.s32 1, %s16
    $region7: #{tpu_custom_call.1} parent=1 // loop_footer_branch
      %15 = sbr.rel target = $region3
    $region8: #{tpu_custom_call.1} parent=1 // loop_exit
      _
    %1979 = vsyncpa [#allocation3], 1
    %s1980 = scalar_lea.sflag [#allocation3], 1
    %1981 = vsyncpa %s1980, 1

</llo_original>
